<compile_context>
chip_gen: v5e
topology: v5e:2x2
jax: 0.10.0
libtpu: 0.0.40
codegen_flags: <defaults>
</compile_context>

<pallas_src>
import functools

import jax
import jax.numpy as jnp
from jax import lax
from jax.experimental import pallas as pl
from jax.experimental.pallas import tpu as pltpu


# ----------------------------------------------------------------------------
# Host-side helpers
# ----------------------------------------------------------------------------
def _largest_divisor_at_most(n, cap):
    cap = max(1, min(int(cap), int(n)))
    for d in range(cap, 0, -1):
        if n % d == 0:
            return d
    return 1


def _choose_ct(C, ct_cap, pack):
    """Largest divisor of C <= ct_cap, preferring sublane-aligned chunk sizes."""
    best, best_aligned = 1, 0
    for d in range(1, max(1, min(C, int(ct_cap))) + 1):
        if C % d == 0:
            best = d
            if d % pack == 0:
                best_aligned = d
    return best_aligned if best_aligned else best


def _tpu_generation():
    try:
        kind = jax.devices()[0].device_kind.lower().replace(" ", "")
    except Exception:
        return "unknown"
    if "v7" in kind or "tpu7" in kind:
        return "v7"
    if "v6" in kind:
        return "v6"
    if "v5" in kind:
        return "v5"
    return "unknown"


def _build_conv_matrices(conv_w, H, W):
    """(2, HW, HW) banded matrices M with conv(out)[p] = max@M[0] + avg@M[1].

    M[cin, q, p] = w[0, cin, ih - oh + pad, iw - ow + pad] for q=(ih,iw),
    p=(oh,ow) inside the KxK band, else 0 ("same" zero padding baked in).
    """
    K = conv_w.shape[-1]
    pad = K // 2
    HW = H * W
    idx = jnp.arange(HW, dtype=jnp.int32)
    r, c = idx // W, idx % W
    dh = r[:, None] - r[None, :] + pad          # (q, p) -> kh
    dw = c[:, None] - c[None, :] + pad          # (q, p) -> kw
    valid = (dh >= 0) & (dh < K) & (dw >= 0) & (dw < K)
    dh_c = jnp.clip(dh, 0, K - 1)
    dw_c = jnp.clip(dw, 0, K - 1)
    w = conv_w.astype(jnp.float32)
    m_max = jnp.where(valid, w[0, 0][dh_c, dw_c], 0.0)
    m_avg = jnp.where(valid, w[0, 1][dh_c, dw_c], 0.0)
    return jnp.stack([m_max, m_avg], axis=0)    # (2, HW, HW) float32


# ----------------------------------------------------------------------------
# In-kernel building blocks
# ----------------------------------------------------------------------------
def _channel_max_mean(x_ref, C, Ct):
    """Channel-wise max and mean of the (Bt, C, HW) block, f32, chunked over C."""
    f32 = jnp.float32
    Bt, _, HW = x_ref.shape
    n_chunks = C // Ct
    if n_chunks <= 8:
        # Static slices; short unrolled loop keeps the LLO scheduler effective.
        xc = x_ref[:, 0:Ct, :]
        mx = jnp.max(xc, axis=1).astype(f32)
        sm = jnp.sum(xc, axis=1, dtype=f32)
        for c0 in range(Ct, C, Ct):
            xc = x_ref[:, c0:c0 + Ct, :]
            mx = jnp.maximum(mx, jnp.max(xc, axis=1).astype(f32))
            sm = sm + jnp.sum(xc, axis=1, dtype=f32)
    else:
        # Many chunks: fori_loop bounds live ranges (a static python `for` does not).
        def body(i, carry):
            mx, sm = carry
            c0 = pl.multiple_of(i * Ct, Ct)
            xc = x_ref[:, pl.ds(c0, Ct), :]
            return (jnp.maximum(mx, jnp.max(xc, axis=1).astype(f32)),
                    sm + jnp.sum(xc, axis=1, dtype=f32))
        mx, sm = lax.fori_loop(
            0, n_chunks, body,
            (jnp.full((Bt, HW), -jnp.inf, f32), jnp.zeros((Bt, HW), f32)))
    return mx, sm * (1.0 / C)


def _apply_attention(x_ref, o_ref, attn, C, Ct):
    """o = x * attn (broadcast over channels), chunked over C, lane-dense stores."""
    out_dt = o_ref.dtype
    # bf16 multiply for bf16 inputs halves vld/vst bytes in this mem-bound
    # epilogue on v6e/v7x; on v5e the VALU widens bf16 anyway (neutral).
    mul_dt = out_dt if out_dt.itemsize < 4 else jnp.float32
    attn_b = attn.astype(mul_dt)[:, None, :]                    # (Bt, 1, HW)
    n_chunks = C // Ct
    if n_chunks <= 8:
        for c0 in range(0, C, Ct):
            xc = x_ref[:, c0:c0 + Ct, :]
            o_ref[:, c0:c0 + Ct, :] = (xc.astype(mul_dt) * attn_b).astype(out_dt)
    else:
        def body(i, _):
            c0 = pl.multiple_of(i * Ct, Ct)
            xc = x_ref[:, pl.ds(c0, Ct), :]
            o_ref[:, pl.ds(c0, Ct), :] = (xc.astype(mul_dt) * attn_b).astype(out_dt)
            return 0
        lax.fori_loop(0, n_chunks, body, 0)


# ----------------------------------------------------------------------------
# Kernels
# ----------------------------------------------------------------------------
def _spatial_attn_matmul_kernel(x_ref, cm_ref, o_ref, *, C, Ct):
    """Conv as a banded-matrix MXU matmul: zero cross-lane shifts."""
    f32 = jnp.float32
    Bt, _, HW = x_ref.shape

    max_map, avg_map = _channel_max_mean(x_ref, C, Ct)

    mm, am = max_map, avg_map
    if Bt < 8:                                   # pad M dim up to one sublane tile
        zp = jnp.zeros((8 - Bt, HW), f32)
        mm = jnp.concatenate([mm, zp], axis=0)
        am = jnp.concatenate([am, zp], axis=0)

    logits = (jnp.dot(mm, cm_ref[0], precision=lax.Precision.HIGHEST,
                      preferred_element_type=f32)
              + jnp.dot(am, cm_ref[1], precision=lax.Precision.HIGHEST,
                        preferred_element_type=f32))
    if Bt < 8:
        logits = logits[0:Bt, :]

    attn = jax.nn.sigmoid(logits)                                # (Bt, HW) f32
    _apply_attention(x_ref, o_ref, attn, C, Ct)


def _spatial_attn_shift_kernel(x_ref, mask_ref, w_ref, o_ref, *, C, H, W, K, Ct):
    """VPU fallback for large HW: flat-layout shift conv with max/avg maps
    stacked along sublanes -> one shifted slice per tap (K*K, not 2*K*K)."""
    f32 = jnp.float32
    pad = K // 2
    HW = H * W
    Bt = x_ref.shape[0]

    max_map, avg_map = _channel_max_mean(x_ref, C, Ct)

    # Zero-pad by pad*(W+1) on both sides so tap (kh, kw) is a pure lane shift
    # of kh*W + kw; out-of-range rows land in the zero pad, out-of-range columns
    # (which would alias neighbouring rows) are killed by the per-kw lane mask.
    plen = pad * (W + 1)
    stk = jnp.concatenate([max_map, avg_map], axis=0)            # (2*Bt, HW)
    zpad = jnp.zeros((2 * Bt, plen), f32)
    pstk = jnp.concatenate([zpad, stk, zpad], axis=1)            # (2*Bt, HW+2*plen)

    row = lax.broadcasted_iota(jnp.int32, (2 * Bt, 1), 0)
    is_max_row = row < Bt                                        # top half = max map

    acc = jnp.zeros((2 * Bt, HW), f32)
    for kw in range(K):
        part = jnp.zeros((2 * Bt, HW), f32)
        for kh in range(K):
            off = kh * W + kw
            w_m = w_ref[0 * K * K + kh * K + kw]                 # SMEM scalars
            w_a = w_ref[1 * K * K + kh * K + kw]
            tap_w = jnp.where(is_max_row, w_m, w_a)              # (2*Bt, 1)
            part = part + pstk[:, off:off + HW] * tap_w
        acc = acc + part * mask_ref[kw:kw + 1, :]                # column-validity mask
    logits = acc[0:Bt, :] + acc[Bt:2 * Bt, :]

    attn = jax.nn.sigmoid(logits)
    _apply_attention(x_ref, o_ref, attn, C, Ct)


# ----------------------------------------------------------------------------
# Wrapper
# ----------------------------------------------------------------------------
def spatial_attention(x, conv_w, *, conv_impl="auto", target_block_bytes=None):
    """x: (B, C, H, W); conv_w: (1, 2, K, K) = nn.Conv2d(2, 1, K, bias=False).weight."""
    B, C, H, W = x.shape
    assert conv_w.shape[0] == 1 and conv_w.shape[1] == 2
    K = conv_w.shape[-1]
    assert K % 2 == 1, "kernel size must be odd"
    pad = K // 2
    HW = H * W

    is_v7x = _tpu_generation() == "v7"

    if target_block_bytes is None:
        # v7x: 64 MiB physical VMEM -> modest blocks; v5e/v6e: 128 MiB -> bigger.
        target_block_bytes = (2 << 20) if is_v7x else (4 << 20)

    # Per-batch bytes of the *padded* (C, HW) slab as it actually sits in VMEM.
    itemsize = jnp.dtype(x.dtype).itemsize
    pack = max(8, 32 // itemsize)                 # sublane packing: 8 f32 / 16 bf16
    c_pad = -(-C // pack) * pack
    hw_pad = -(-HW // 128) * 128
    per_batch = c_pad * hw_pad * itemsize

    bt_cap = max(1, target_block_bytes // per_batch)
    if is_v7x and B >= 2:
        # v7x only: keep >= 2 grid steps so the "parallel" batch axis can shard
        # across both TensorCores.  On v5e/v6e (1 TC) this would only shrink the
        # DMA block and add per-step overhead.
        bt_cap = min(bt_cap, max(1, B // 2))
    bt_cap = min(bt_cap, 256)
    Bt = _largest_divisor_at_most(B, bt_cap)
    if is_v7x and B >= 2 and (B // Bt) % 2:
        for d in range(Bt, 0, -1):                # prefer an even number of steps
            if B % d == 0 and (B // d) % 2 == 0:
                Bt = d
                break

    # Channel chunk: per-chunk temporary (Bt, Ct, HW) f32 <= ~512 KiB.
    ct_cap = max(1, (512 * 1024) // max(1, Bt * hw_pad * 4))
    Ct = _choose_ct(C, ct_cap, pack)

    cm_bytes = 2 * HW * HW * 4
    if conv_impl == "auto":
        conv_impl = ("matmul"
                     if cm_bytes <= ((8 << 20) if is_v7x else (16 << 20))
                     else "shift")

    x_flat = x.reshape(B, C, HW)                  # free XLA reshape
    block_bytes = Bt * per_batch

    if conv_impl == "matmul":
        cm = _build_conv_matrices(conv_w, H, W)   # (2, HW, HW) f32, grid-invariant
        const_bytes = cm_bytes
        kernel = functools.partial(_spatial_attn_matmul_kernel, C=C, Ct=Ct)
        in_specs = [
            pl.BlockSpec((Bt, C, HW), lambda b: (b, 0, 0)),
            pl.BlockSpec((2, HW, HW), lambda b: (0, 0, 0)),
        ]
        extra_inputs = (cm,)
    else:
        if W <= pad:
            # TODO(synk): W <= pad (very narrow images) needs extra row masking
            # in the flat-layout shift conv; use the matmul path instead there.
            raise NotImplementedError("shift conv path requires W > kernel_size // 2")
        col = jnp.arange(HW, dtype=jnp.int32) % W
        masks = jnp.stack(
            [((col + (kw - pad) >= 0) & (col + (kw - pad) < W)).astype(jnp.float32)
             for kw in range(K)], axis=0)                       # (K, HW)
        w_flat = conv_w.reshape(-1).astype(jnp.float32)         # (2*K*K,) -> SMEM
        const_bytes = K * hw_pad * 4
        kernel = functools.partial(_spatial_attn_shift_kernel,
                                   C=C, H=H, W=W, K=K, Ct=Ct)
        in_specs = [
            pl.BlockSpec((Bt, C, HW), lambda b: (b, 0, 0)),
            pl.BlockSpec((K, HW), lambda b: (0, 0)),
            pl.BlockSpec(memory_space=pltpu.MemorySpace.SMEM),
        ]
        extra_inputs = (masks, w_flat)

    vmem_cap = (40 << 20) if is_v7x else (96 << 20)
    vmem_needed = 4 * block_bytes + 2 * const_bytes + (4 << 20)
    vmem_limit = int(min(vmem_cap, max(32 << 20, vmem_needed)))

    # TODO(synk): on v7x, profile whether both TensorCores are active with plain
    # "parallel"; if not, switch the batch axis to pltpu.CORE_PARALLEL.
    out_flat = pl.pallas_call(
        kernel,
        out_shape=jax.ShapeDtypeStruct((B, C, HW), x.dtype),
        grid=(B // Bt,),
        in_specs=in_specs,
        out_specs=pl.BlockSpec((Bt, C, HW), lambda b: (b, 0, 0)),
        compiler_params=pltpu.CompilerParams(
            dimension_semantics=("parallel",),
            vmem_limit_bytes=vmem_limit,
        ),
    )(x_flat, *extra_inputs)

    return out_flat.reshape(B, C, H, W)


def spatial_attention_ref(x, conv_w):
    """Pure-JAX reference matching the PyTorch forward exactly."""
    max_out = jnp.max(x, axis=1, keepdims=True)
    avg_out = jnp.mean(x, axis=1, keepdims=True)
    out = jnp.concatenate([max_out, avg_out], axis=1)           # (B, 2, H, W)
    pad = conv_w.shape[-1] // 2
    conv = lax.conv_general_dilated(
        out, conv_w.astype(jnp.float32), window_strides=(1, 1),
        padding=[(pad, pad), (pad, pad)],
        dimension_numbers=("NCHW", "OIHW", "NCHW"),
        precision=lax.Precision.HIGHEST)
    return x * jax.nn.sigmoid(conv)


if __name__ == "__main__":
    key = jax.random.PRNGKey(0)
    kx, kw = jax.random.split(key)

    B, C, H, W = 2, 4, 16, 16
    K = 7

    x = jax.random.normal(kx, (B, C, H, W), dtype=jnp.float32)
    # Synthetic weights, shape matches nn.Conv2d(2, 1, 7, padding=3, bias=False).
    conv_w = 0.05 * jax.random.normal(kw, (1, 2, K, K), dtype=jnp.float32)

    ref = spatial_attention_ref(x, conv_w)

    out = spatial_attention(x, conv_w)                       # auto -> MXU matmul path
    out = jax.block_until_ready(out)
    assert out.shape == (B, C, H, W)
    assert jnp.allclose(out, ref, atol=2e-3, rtol=2e-3), "matmul path mismatch"

    out_s = spatial_attention(x, conv_w, conv_impl="shift")  # exercise VPU fallback
    out_s = jax.block_until_ready(out_s)
    assert jnp.allclose(out_s, ref, atol=2e-3, rtol=2e-3), "shift path mismatch"

    print("KERNEL_OK")
</pallas_src>

<mosaic_0001>
module attributes {stable_mosaic.version = 11 : i64} {
  func.func @_spatial_attn_matmul_kernel(%arg0: i32, %arg1: memref<2x4x256xf32, #tpu.memory_space<vmem>>, %arg2: memref<2x256x256xf32, #tpu.memory_space<vmem>>, %arg3: memref<2x4x256xf32, #tpu.memory_space<vmem>>) attributes {dimension_semantics = [#tpu.dimension_semantics<parallel>], iteration_bounds = array<i64: 1>, scalar_prefetch = 0 : i64, scratch_operands = 0 : i64, tpu.core_type = #tpu.core_type<tc>, window_params = [{transform_indices = @transform_0, window_bounds = array<i64: 2, 4, 256>}, {pipeline_mode = #tpu.pipeline_mode<synchronous>, transform_indices = @transform_1, window_bounds = array<i64: 2, 256, 256>}, {transform_indices = @transform_2, window_bounds = array<i64: 2, 4, 256>}]} {
    %c0 = arith.constant 0 : index
    %c0_0 = arith.constant 0 : index
    %c0_1 = arith.constant 0 : index
    %0 = vector.load %arg1[%c0, %c0_0, %c0_1] : memref<2x4x256xf32, #tpu.memory_space<vmem>>, vector<2x4x256xf32>
    %cst = arith.constant dense<0xFF800000> : vector<2x256xf32>
    %1 = vector.multi_reduction <maximumf>, %0, %cst [1] : vector<2x4x256xf32> to vector<2x256xf32>
    %cst_2 = arith.constant dense<0.000000e+00> : vector<2x256xf32>
    %2 = vector.multi_reduction <add>, %0, %cst_2 [1] : vector<2x4x256xf32> to vector<2x256xf32>
    %cst_3 = arith.constant 2.500000e-01 : f32
    %3 = vector.broadcast %cst_3 : f32 to vector<2x256xf32>
    %4 = arith.mulf %2, %3 : vector<2x256xf32>
    %cst_4 = arith.constant 0.000000e+00 : f32
    %5 = vector.broadcast %cst_4 : f32 to vector<6x256xf32>
    %6 = tpu.concatenate %1, %5 in 0 : vector<2x256xf32>, vector<6x256xf32> -> vector<8x256xf32>
    %7 = tpu.concatenate %4, %5 in 0 : vector<2x256xf32>, vector<6x256xf32> -> vector<8x256xf32>
    %c0_5 = arith.constant 0 : index
    %c0_6 = arith.constant 0 : index
    %c0_7 = arith.constant 0 : index
    %8 = vector.load %arg2[%c0_5, %c0_6, %c0_7] : memref<2x256x256xf32, #tpu.memory_space<vmem>>, vector<1x256x256xf32>
    %9 = vector.shape_cast %8 : vector<1x256x256xf32> to vector<256x256xf32>
    %cst_8 = arith.constant dense<0.000000e+00> : vector<8x256xf32>
    %10 = tpu.matmul %6, %9, %cst_8 {dimension_numbers = #tpu.dot_dimension_numbers<[1], [0], [0], [1], [0, 0, 1, 1], [], []>, precision = #tpu.contract_precision<fp32>} : vector<8x256xf32>, vector<256x256xf32>, vector<8x256xf32> -> vector<8x256xf32>
    %c1 = arith.constant 1 : index
    %c0_9 = arith.constant 0 : index
    %c0_10 = arith.constant 0 : index
    %11 = vector.load %arg2[%c1, %c0_9, %c0_10] : memref<2x256x256xf32, #tpu.memory_space<vmem>>, vector<1x256x256xf32>
    %12 = vector.shape_cast %11 : vector<1x256x256xf32> to vector<256x256xf32>
    %cst_11 = arith.constant dense<0.000000e+00> : vector<8x256xf32>
    %13 = tpu.matmul %7, %12, %cst_11 {dimension_numbers = #tpu.dot_dimension_numbers<[1], [0], [0], [1], [0, 0, 1, 1], [], []>, precision = #tpu.contract_precision<fp32>} : vector<8x256xf32>, vector<256x256xf32>, vector<8x256xf32> -> vector<8x256xf32>
    %14 = arith.addf %10, %13 : vector<8x256xf32>
    %15 = vector.extract_strided_slice %14 {offsets = [0, 0], sizes = [2, 256], strides = [1, 1]} : vector<8x256xf32> to vector<2x256xf32>
    %16 = arith.negf %15 : vector<2x256xf32>
    %17 = math.exp %16 : vector<2x256xf32>
    %cst_12 = arith.constant 1.000000e+00 : f32
    %18 = vector.broadcast %cst_12 : f32 to vector<2x256xf32>
    %19 = arith.addf %18, %17 : vector<2x256xf32>
    %20 = arith.divf %18, %19 : vector<2x256xf32>
    %21 = vector.shape_cast %20 : vector<2x256xf32> to vector<2x1x256xf32>
    %c0_13 = arith.constant 0 : index
    %c0_14 = arith.constant 0 : index
    %c0_15 = arith.constant 0 : index
    %22 = vector.load %arg1[%c0_13, %c0_14, %c0_15] : memref<2x4x256xf32, #tpu.memory_space<vmem>>, vector<2x4x256xf32>
    %23 = vector.broadcast %21 : vector<2x1x256xf32> to vector<2x4x256xf32>
    %24 = arith.mulf %22, %23 : vector<2x4x256xf32>
    %c0_16 = arith.constant 0 : index
    %c0_17 = arith.constant 0 : index
    %c0_18 = arith.constant 0 : index
    %25 = vector.load %arg3[%c0_16, %c0_17, %c0_18] : memref<2x4x256xf32, #tpu.memory_space<vmem>>, vector<2x4x256xf32>
    tpu.vector_store %arg3[%c0_16, %c0_17, %c0_18], %24 {strides = array<i32>} : memref<2x4x256xf32, #tpu.memory_space<vmem>>, vector<2x4x256xf32>,
    return
  }
  func.func @transform_0(%arg0: i32) -> (i32, i32, i32) {
    %c0_i32 = arith.constant 0 : i32
    %c0_i32_0 = arith.constant 0 : i32
    %c0_i32_1 = arith.constant 0 : i32
    return %arg0, %c0_i32, %c0_i32_0 : i32, i32, i32
  }
  func.func @transform_1(%arg0: i32) -> (i32, i32, i32) {
    %c0_i32 = arith.constant 0 : i32
    %c0_i32_0 = arith.constant 0 : i32
    %c0_i32_1 = arith.constant 0 : i32
    %c0_i32_2 = arith.constant 0 : i32
    return %c0_i32, %c0_i32_0, %c0_i32_1 : i32, i32, i32
  }
  func.func @transform_2(%arg0: i32) -> (i32, i32, i32) {
    %c0_i32 = arith.constant 0 : i32
    %c0_i32_0 = arith.constant 0 : i32
    %c0_i32_1 = arith.constant 0 : i32
    return %arg0, %c0_i32, %c0_i32_0 : i32, i32, i32
  }
}

</mosaic_0001>

<llo_original>
// kernel: tpu_custom_call.1
$region0: #{tpu_custom_call.1}
  #allocation0 [shape = 'u32[]', space=smem, size = 0x4, offset = 0x4, fixed_abs, tag = 'smem constant byte address 0x4 - core index']
  #allocation1 [shape = 'u32[72,128]{1,0:T(1,128)}', space=vmem, size = 0x9000, scoped, tag = 'internal scratch']
  %s0 = inlined_call_operand.hbm [shape: f32[2,4,256], index: 0, kind: input, shape index: {}]
  %s1 = inlined_call_operand.hbm [shape: f32[2,256,256], index: 1, kind: input, shape index: {}]
  %s2 = inlined_call_operand.hbm [shape: f32[2,4,256], index: 2, kind: output, shape index: {}]
  %s3 = sld [smem:[#allocation0]]
  $region26: #{tpu_custom_call.1} parent=0
    _
  %s5 = ssub.s32 1, %s3
  %s6 = scalar_select 0, %s5, %s3
  $region1: #{tpu_custom_call.1} parent=0
    #allocation2 [shape = 'u8[8192]{0}', space=vmem, size = 0x2000, scoped, tag = 'input window, operand 0, single buffered']
    #allocation3 [shape = 's32[1]{0}', space=sflag, size = 0x4, scoped, tag = 'scoped memory for tpu_custom_call.1']
    #allocation4 [shape = 's32[1]{0}', space=sflag, size = 0x4, scoped, tag = 'scoped memory for tpu_custom_call.1']
    #allocation5 [shape = 'u8[524288]{0}', space=vmem, size = 0x80000, scoped, tag = 'input window, operand 1, single buffered']
    #allocation6 [shape = 's32[1]{0}', space=sflag, size = 0x4, scoped, tag = 'scoped memory for tpu_custom_call.1']
    #allocation7 [shape = 'u8[8192]{0}', space=vmem, size = 0x2000, scoped, tag = 'output window, operand 0, single buffered']
    %7 = vsyncpa [#allocation3], 0
    %8 = vsyncpa [#allocation6], 0
    %9 = vsyncpa [#allocation4], 0
    // Predicated region
    $region2: #{tpu_custom_call.1} parent=1 // pred_check
      _
    $region3: #{tpu_custom_call.1} parent=1 // pred_check_branch
      %11 = sbr.rel (0) target = $region5
    $region4: #{tpu_custom_call.1} parent=1 // pred_region
      %13 = vsyncadd [#allocation3], 0
      %s14 = sshll.u32 %s0, 4
      %s15 = int_to_ptr.hbm [resolvable:$true] %s14
      %s16 = sshll.u32 [#allocation2], 4
      %s17 = int_to_ptr.vmem [resolvable:$true] %s16
      %22 = dma.hbm_to_vmem [thread:$0]  %s15, 256, %s17, [#allocation3], 128, 128, 8
    $region5: #{tpu_custom_call.1} parent=1 // pred_fallthru
      _
    // Predicated region
    $region6: #{tpu_custom_call.1} parent=1 // pred_check
      _
    $region7: #{tpu_custom_call.1} parent=1 // pred_check_branch
      %24 = sbr.rel (0) target = $region9
    $region8: #{tpu_custom_call.1} parent=1 // pred_region
      %26 = vsyncadd [#allocation6], 0
      %s27 = sshll.u32 %s1, 4
      %s28 = int_to_ptr.hbm [resolvable:$true] %s27
      %s29 = sshll.u32 [#allocation5], 4
      %s30 = int_to_ptr.vmem [resolvable:$true] %s29
      %35 = dma.hbm_to_vmem [thread:$0]  %s28, 16384, %s30, [#allocation6], 256, 256, 16
    $region9: #{tpu_custom_call.1} parent=1 // pred_fallthru
      _
    // Predicated region
    $region10: #{tpu_custom_call.1} parent=1 // pred_check
      _
    $region11: #{tpu_custom_call.1} parent=1 // pred_check_branch
      %37 = sbr.rel (0) target = $region13
    $region12: #{tpu_custom_call.1} parent=1 // pred_region
      %39 = dma.done [#allocation3], 256
    $region13: #{tpu_custom_call.1} parent=1 // pred_fallthru
      _
    // Predicated region
    $region14: #{tpu_custom_call.1} parent=1 // pred_check
      _
    $region15: #{tpu_custom_call.1} parent=1 // pred_check_branch
      %41 = sbr.rel (0) target = $region17
    $region16: #{tpu_custom_call.1} parent=1 // pred_region
      %43 = dma.done [#allocation6], 16384
    $region17: #{tpu_custom_call.1} parent=1 // pred_fallthru
      _
    %v44 = vld [vmem:[#allocation2] sm:$0xff]
    %v45 = vld [vmem:[#allocation2 + $0x8] sm:$0xff]
    %48 = vst [vmem:[#allocation1] ss:$2 sm:$0xff] %v44
    %v49 = vld.sshfl [vmem:[#allocation1] sm:$0xff pattern:$0x75316420]
    %v50 = vld.sshfl [vmem:[#allocation1 + $0x8] sm:$0xff pattern:$0x75316420]
    %s51 = scalar_lea.vmem [#allocation1], 16
    %52 = vst [vmem:[%s51] ss:$2 sm:$0xff] %v45
    %v53 = vld.sshfl [vmem:[#allocation1 + $0x10] sm:$0xff pattern:$0x75316420]
    %v54 = vld.sshfl [vmem:[#allocation1 + $0x18] sm:$0xff pattern:$0x75316420]
    %vm59 = vcmask 1043456
    %v60 = vsel %vm59, %v49, -inf
    %v61 = vrot.slane %v60, 4
    %v62 = vmax.f32 %v60, %v61
    %v63 = vrot.slane %v62, 2
    %v64 = vmax.f32 %v62, %v63
    %v65 = vrot.slane %v64, 1
    %v66 = vmax.f32 %v64, %v65
    %v67 = vsel %vm59, %v50, -inf
    %v68 = vrot.slane %v67, 4
    %v69 = vmax.f32 %v67, %v68
    %v70 = vrot.slane %v69, 2
    %v71 = vmax.f32 %v69, %v70
    %v72 = vrot.slane %v71, 1
    %v73 = vmax.f32 %v71, %v72
    %v74 = vsel %vm59, %v53, -inf
    %v75 = vrot.slane %v74, 4
    %v76 = vmax.f32 %v74, %v75
    %v77 = vrot.slane %v76, 2
    %v78 = vmax.f32 %v76, %v77
    %v79 = vrot.slane %v78, 1
    %v80 = vmax.f32 %v78, %v79
    %v81 = vsel %vm59, %v54, -inf
    %v82 = vrot.slane %v81, 4
    %v83 = vmax.f32 %v81, %v82
    %v84 = vrot.slane %v83, 2
    %v85 = vmax.f32 %v83, %v84
    %v86 = vrot.slane %v85, 1
    %v87 = vmax.f32 %v85, %v86
    %88 = vst [vmem:[#allocation1] ss:$2 sm:$0xff] %v44
    %v89 = vld.sshfl [vmem:[#allocation1] sm:$0xff pattern:$0x75316420]
    %v90 = vld.sshfl [vmem:[#allocation1 + $0x8] sm:$0xff pattern:$0x75316420]
    %s91 = scalar_lea.vmem [#allocation1], 16
    %92 = vst [vmem:[%s91] ss:$2 sm:$0xff] %v45
    %v93 = vld.sshfl [vmem:[#allocation1 + $0x10] sm:$0xff pattern:$0x75316420]
    %v94 = vld.sshfl [vmem:[#allocation1 + $0x18] sm:$0xff pattern:$0x75316420]
    %v99 = vsel %vm59, %v89, 0.0
    %v100 = vrot.slane %v99, 4
    %v101 = vadd.f32 %v99, %v100
    %v102 = vrot.slane %v101, 2
    %v103 = vadd.f32 %v101, %v102
    %v104 = vrot.slane %v103, 1
    %v105 = vadd.f32 %v103, %v104
    %v106 = vsel %vm59, %v90, 0.0
    %v107 = vrot.slane %v106, 4
    %v108 = vadd.f32 %v106, %v107
    %v109 = vrot.slane %v108, 2
    %v110 = vadd.f32 %v108, %v109
    %v111 = vrot.slane %v110, 1
    %v112 = vadd.f32 %v110, %v111
    %v113 = vsel %vm59, %v93, 0.0
    %v114 = vrot.slane %v113, 4
    %v115 = vadd.f32 %v113, %v114
    %v116 = vrot.slane %v115, 2
    %v117 = vadd.f32 %v115, %v116
    %v118 = vrot.slane %v117, 1
    %v119 = vadd.f32 %v117, %v118
    %v120 = vsel %vm59, %v94, 0.0
    %v121 = vrot.slane %v120, 4
    %v122 = vadd.f32 %v120, %v121
    %v123 = vrot.slane %v122, 2
    %v124 = vadd.f32 %v122, %v123
    %v125 = vrot.slane %v124, 1
    %v126 = vadd.f32 %v124, %v125
    %v127 = vmul.f32 %v105, 0.25
    %v128 = vmul.f32 %v112, 0.25
    %v129 = vmul.f32 %v119, 0.25
    %v130 = vmul.f32 %v126, 0.25
    %vm135 = vcmask 1041409
    %v136 = vsel %vm135, %v80, %v66
    %v137 = vsel %vm135, %v87, %v73
    %vm140 = vcmask 1041408
    %v141 = vsel %vm140, %v136, 0.0
    %v142 = vsel %vm140, %v137, 0.0
    %v147 = vsel %vm135, %v129, %v127
    %v148 = vsel %vm135, %v130, %v128
    %v151 = vsel %vm140, %v147, 0.0
    %v152 = vsel %vm140, %v148, 0.0
    %v153 = vld [vmem:[#allocation5] sm:$0xff]
    %v154 = vld [vmem:[#allocation5 + $0x8] sm:$0xff]
    %v155 = vld [vmem:[#allocation5 + $0x10] sm:$0xff]
    %v156 = vld [vmem:[#allocation5 + $0x18] sm:$0xff]
    %v157 = vld [vmem:[#allocation5 + $0x20] sm:$0xff]
    %v158 = vld [vmem:[#allocation5 + $0x28] sm:$0xff]
    %v159 = vld [vmem:[#allocation5 + $0x30] sm:$0xff]
    %v160 = vld [vmem:[#allocation5 + $0x38] sm:$0xff]
    %v161 = vld [vmem:[#allocation5 + $0x40] sm:$0xff]
    %v162 = vld [vmem:[#allocation5 + $0x48] sm:$0xff]
    %v163 = vld [vmem:[#allocation5 + $0x50] sm:$0xff]
    %v164 = vld [vmem:[#allocation5 + $0x58] sm:$0xff]
    %v165 = vld [vmem:[#allocation5 + $0x60] sm:$0xff]
    %v166 = vld [vmem:[#allocation5 + $0x68] sm:$0xff]
    %v167 = vld [vmem:[#allocation5 + $0x70] sm:$0xff]
    %v168 = vld [vmem:[#allocation5 + $0x78] sm:$0xff]
    %v169 = vld [vmem:[#allocation5 + $0x80] sm:$0xff]
    %v170 = vld [vmem:[#allocation5 + $0x88] sm:$0xff]
    %v171 = vld [vmem:[#allocation5 + $0x90] sm:$0xff]
    %v172 = vld [vmem:[#allocation5 + $0x98] sm:$0xff]
    %v173 = vld [vmem:[#allocation5 + $0xa0] sm:$0xff]
    %v174 = vld [vmem:[#allocation5 + $0xa8] sm:$0xff]
    %v175 = vld [vmem:[#allocation5 + $0xb0] sm:$0xff]
    %v176 = vld [vmem:[#allocation5 + $0xb8] sm:$0xff]
    %v177 = vld [vmem:[#allocation5 + $0xc0] sm:$0xff]
    %v178 = vld [vmem:[#allocation5 + $0xc8] sm:$0xff]
    %v179 = vld [vmem:[#allocation5 + $0xd0] sm:$0xff]
    %v180 = vld [vmem:[#allocation5 + $0xd8] sm:$0xff]
    %v181 = vld [vmem:[#allocation5 + $0xe0] sm:$0xff]
    %v182 = vld [vmem:[#allocation5 + $0xe8] sm:$0xff]
    %v183 = vld [vmem:[#allocation5 + $0xf0] sm:$0xff]
    %v184 = vld [vmem:[#allocation5 + $0xf8] sm:$0xff]
    %v185 = vld [vmem:[#allocation5 + $0x100] sm:$0xff]
    %v186 = vld [vmem:[#allocation5 + $0x108] sm:$0xff]
    %v187 = vld [vmem:[#allocation5 + $0x110] sm:$0xff]
    %v188 = vld [vmem:[#allocation5 + $0x118] sm:$0xff]
    %v189 = vld [vmem:[#allocation5 + $0x120] sm:$0xff]
    %v190 = vld [vmem:[#allocation5 + $0x128] sm:$0xff]
    %v191 = vld [vmem:[#allocation5 + $0x130] sm:$0xff]
    %v192 = vld [vmem:[#allocation5 + $0x138] sm:$0xff]
    %v193 = vld [vmem:[#allocation5 + $0x140] sm:$0xff]
    %v194 = vld [vmem:[#allocation5 + $0x148] sm:$0xff]
    %v195 = vld [vmem:[#allocation5 + $0x150] sm:$0xff]
    %v196 = vld [vmem:[#allocation5 + $0x158] sm:$0xff]
    %v197 = vld [vmem:[#allocation5 + $0x160] sm:$0xff]
    %v198 = vld [vmem:[#allocation5 + $0x168] sm:$0xff]
    %v199 = vld [vmem:[#allocation5 + $0x170] sm:$0xff]
    %v200 = vld [vmem:[#allocation5 + $0x178] sm:$0xff]
    %v201 = vld [vmem:[#allocation5 + $0x180] sm:$0xff]
    %v202 = vld [vmem:[#allocation5 + $0x188] sm:$0xff]
    %v203 = vld [vmem:[#allocation5 + $0x190] sm:$0xff]
    %v204 = vld [vmem:[#allocation5 + $0x198] sm:$0xff]
    %v205 = vld [vmem:[#allocation5 + $0x1a0] sm:$0xff]
    %v206 = vld [vmem:[#allocation5 + $0x1a8] sm:$0xff]
    %v207 = vld [vmem:[#allocation5 + $0x1b0] sm:$0xff]
    %v208 = vld [vmem:[#allocation5 + $0x1b8] sm:$0xff]
    %v209 = vld [vmem:[#allocation5 + $0x1c0] sm:$0xff]
    %v210 = vld [vmem:[#allocation5 + $0x1c8] sm:$0xff]
    %v211 = vld [vmem:[#allocation5 + $0x1d0] sm:$0xff]
    %v212 = vld [vmem:[#allocation5 + $0x1d8] sm:$0xff]
    %v213 = vld [vmem:[#allocation5 + $0x1e0] sm:$0xff]
    %v214 = vld [vmem:[#allocation5 + $0x1e8] sm:$0xff]
    %v215 = vld [vmem:[#allocation5 + $0x1f0] sm:$0xff]
    %v216 = vld [vmem:[#allocation5 + $0x1f8] sm:$0xff]
    %s217 = scalar_lea.vmem [#allocation5], 512
    %v218 = vld [vmem:[%s217] sm:$0xff]
    %v219 = vld [vmem:[%s217 + $0x8] sm:$0xff]
    %v220 = vld [vmem:[%s217 + $0x10] sm:$0xff]
    %v221 = vld [vmem:[%s217 + $0x18] sm:$0xff]
    %v222 = vld [vmem:[%s217 + $0x20] sm:$0xff]
    %v223 = vld [vmem:[%s217 + $0x28] sm:$0xff]
    %v224 = vld [vmem:[%s217 + $0x30] sm:$0xff]
    %v225 = vld [vmem:[%s217 + $0x38] sm:$0xff]
    %v226 = vld [vmem:[%s217 + $0x40] sm:$0xff]
    %v227 = vld [vmem:[%s217 + $0x48] sm:$0xff]
    %v228 = vld [vmem:[%s217 + $0x50] sm:$0xff]
    %v229 = vld [vmem:[%s217 + $0x58] sm:$0xff]
    %v230 = vld [vmem:[%s217 + $0x60] sm:$0xff]
    %v231 = vld [vmem:[%s217 + $0x68] sm:$0xff]
    %v232 = vld [vmem:[%s217 + $0x70] sm:$0xff]
    %v233 = vld [vmem:[%s217 + $0x78] sm:$0xff]
    %v234 = vld [vmem:[%s217 + $0x80] sm:$0xff]
    %v235 = vld [vmem:[%s217 + $0x88] sm:$0xff]
    %v236 = vld [vmem:[%s217 + $0x90] sm:$0xff]
    %v237 = vld [vmem:[%s217 + $0x98] sm:$0xff]
    %v238 = vld [vmem:[%s217 + $0xa0] sm:$0xff]
    %v239 = vld [vmem:[%s217 + $0xa8] sm:$0xff]
    %v240 = vld [vmem:[%s217 + $0xb0] sm:$0xff]
    %v241 = vld [vmem:[%s217 + $0xb8] sm:$0xff]
    %v242 = vld [vmem:[%s217 + $0xc0] sm:$0xff]
    %v243 = vld [vmem:[%s217 + $0xc8] sm:$0xff]
    %v244 = vld [vmem:[%s217 + $0xd0] sm:$0xff]
    %v245 = vld [vmem:[%s217 + $0xd8] sm:$0xff]
    %v246 = vld [vmem:[%s217 + $0xe0] sm:$0xff]
    %v247 = vld [vmem:[%s217 + $0xe8] sm:$0xff]
    %v248 = vld [vmem:[%s217 + $0xf0] sm:$0xff]
    %v249 = vld [vmem:[%s217 + $0xf8] sm:$0xff]
    %v250 = vld [vmem:[%s217 + $0x100] sm:$0xff]
    %v251 = vld [vmem:[%s217 + $0x108] sm:$0xff]
    %v252 = vld [vmem:[%s217 + $0x110] sm:$0xff]
    %v253 = vld [vmem:[%s217 + $0x118] sm:$0xff]
    %v254 = vld [vmem:[%s217 + $0x120] sm:$0xff]
    %v255 = vld [vmem:[%s217 + $0x128] sm:$0xff]
    %v256 = vld [vmem:[%s217 + $0x130] sm:$0xff]
    %v257 = vld [vmem:[%s217 + $0x138] sm:$0xff]
    %v258 = vld [vmem:[%s217 + $0x140] sm:$0xff]
    %v259 = vld [vmem:[%s217 + $0x148] sm:$0xff]
    %v260 = vld [vmem:[%s217 + $0x150] sm:$0xff]
    %v261 = vld [vmem:[%s217 + $0x158] sm:$0xff]
    %v262 = vld [vmem:[%s217 + $0x160] sm:$0xff]
    %v263 = vld [vmem:[%s217 + $0x168] sm:$0xff]
    %v264 = vld [vmem:[%s217 + $0x170] sm:$0xff]
    %v265 = vld [vmem:[%s217 + $0x178] sm:$0xff]
    %v266 = vld [vmem:[%s217 + $0x180] sm:$0xff]
    %v267 = vld [vmem:[%s217 + $0x188] sm:$0xff]
    %v268 = vld [vmem:[%s217 + $0x190] sm:$0xff]
    %v269 = vld [vmem:[%s217 + $0x198] sm:$0xff]
    %v270 = vld [vmem:[%s217 + $0x1a0] sm:$0xff]
    %v271 = vld [vmem:[%s217 + $0x1a8] sm:$0xff]
    %v272 = vld [vmem:[%s217 + $0x1b0] sm:$0xff]
    %v273 = vld [vmem:[%s217 + $0x1b8] sm:$0xff]
    %v274 = vld [vmem:[%s217 + $0x1c0] sm:$0xff]
    %v275 = vld [vmem:[%s217 + $0x1c8] sm:$0xff]
    %v276 = vld [vmem:[%s217 + $0x1d0] sm:$0xff]
    %v277 = vld [vmem:[%s217 + $0x1d8] sm:$0xff]
    %v278 = vld [vmem:[%s217 + $0x1e0] sm:$0xff]
    %v279 = vld [vmem:[%s217 + $0x1e8] sm:$0xff]
    %v280 = vld [vmem:[%s217 + $0x1f0] sm:$0xff]
    %v281 = vld [vmem:[%s217 + $0x1f8] sm:$0xff]
    %v282 = vand.u32 %v248, 4294901760
    %283 = vmatpush.msra.mxu0 %v282
    %v284 = vand.u32 %v246, 4294901760
    %285 = vmatpush.msra.mxu0 %v284
    %v286 = vand.u32 %v244, 4294901760
    %287 = vmatpush.msra.mxu0 %v286
    %v288 = vand.u32 %v242, 4294901760
    %289 = vmatpush.msra.mxu0 %v288
    %v290 = vand.u32 %v240, 4294901760
    %291 = vmatpush.msra.mxu0 %v290
    %v292 = vand.u32 %v238, 4294901760
    %293 = vmatpush.msra.mxu0 %v292
    %v294 = vand.u32 %v236, 4294901760
    %295 = vmatpush.msra.mxu0 %v294
    %v296 = vand.u32 %v234, 4294901760
    %297 = vmatpush.msra.mxu0 %v296
    %v298 = vand.u32 %v232, 4294901760
    %299 = vmatpush.msra.mxu0 %v298
    %v300 = vand.u32 %v230, 4294901760
    %301 = vmatpush.msra.mxu0 %v300
    %v302 = vand.u32 %v228, 4294901760
    %303 = vmatpush.msra.mxu0 %v302
    %v304 = vand.u32 %v226, 4294901760
    %305 = vmatpush.msra.mxu0 %v304
    %v306 = vand.u32 %v224, 4294901760
    %307 = vmatpush.msra.mxu0 %v306
    %v308 = vand.u32 %v222, 4294901760
    %309 = vmatpush.msra.mxu0 %v308
    %v310 = vand.u32 %v220, 4294901760
    %311 = vmatpush.msra.mxu0 %v310
    %v312 = vand.u32 %v218, 4294901760
    %313 = vmatpush.msra.mxu0 %v312
    %v314 = vand.u32 %v151, 4294901760
    %v315 = vsub.f32 %v151, %v314
    %v316 = vand.u32 %v315, 4294901760
    %v317 = vsub.f32 %v315, %v316
    %v318 = vand.u32 %v317, 4294901760
    %319 = vmatmul.f32.gmra.mxu0 %v318
    %v320 = vpop.f32.mrf.mxu0
    %v321 = vadd.f32 0.0, %v320
    %322 = vdwg.mxu0
    %v323 = vand.u32 %v248, 4294901760
    %v324 = vsub.f32 %v248, %v323
    %v325 = vand.u32 %v324, 4294901760
    %v326 = vsub.f32 %v324, %v325
    %v327 = vand.u32 %v326, 4294901760
    %328 = vmatpush.msra.mxu0 %v327
    %v329 = vand.u32 %v246, 4294901760
    %v330 = vsub.f32 %v246, %v329
    %v331 = vand.u32 %v330, 4294901760
    %v332 = vsub.f32 %v330, %v331
    %v333 = vand.u32 %v332, 4294901760
    %334 = vmatpush.msra.mxu0 %v333
    %v335 = vand.u32 %v244, 4294901760
    %v336 = vsub.f32 %v244, %v335
    %v337 = vand.u32 %v336, 4294901760
    %v338 = vsub.f32 %v336, %v337
    %v339 = vand.u32 %v338, 4294901760
    %340 = vmatpush.msra.mxu0 %v339
    %v341 = vand.u32 %v242, 4294901760
    %v342 = vsub.f32 %v242, %v341
    %v343 = vand.u32 %v342, 4294901760
    %v344 = vsub.f32 %v342, %v343
    %v345 = vand.u32 %v344, 4294901760
    %346 = vmatpush.msra.mxu0 %v345
    %v347 = vand.u32 %v240, 4294901760
    %v348 = vsub.f32 %v240, %v347
    %v349 = vand.u32 %v348, 4294901760
    %v350 = vsub.f32 %v348, %v349
    %v351 = vand.u32 %v350, 4294901760
    %352 = vmatpush.msra.mxu0 %v351
    %v353 = vand.u32 %v238, 4294901760
    %v354 = vsub.f32 %v238, %v353
    %v355 = vand.u32 %v354, 4294901760
    %v356 = vsub.f32 %v354, %v355
    %v357 = vand.u32 %v356, 4294901760
    %358 = vmatpush.msra.mxu0 %v357
    %v359 = vand.u32 %v236, 4294901760
    %v360 = vsub.f32 %v236, %v359
    %v361 = vand.u32 %v360, 4294901760
    %v362 = vsub.f32 %v360, %v361
    %v363 = vand.u32 %v362, 4294901760
    %364 = vmatpush.msra.mxu0 %v363
    %v365 = vand.u32 %v234, 4294901760
    %v366 = vsub.f32 %v234, %v365
    %v367 = vand.u32 %v366, 4294901760
    %v368 = vsub.f32 %v366, %v367
    %v369 = vand.u32 %v368, 4294901760
    %370 = vmatpush.msra.mxu0 %v369
    %v371 = vand.u32 %v232, 4294901760
    %v372 = vsub.f32 %v232, %v371
    %v373 = vand.u32 %v372, 4294901760
    %v374 = vsub.f32 %v372, %v373
    %v375 = vand.u32 %v374, 4294901760
    %376 = vmatpush.msra.mxu0 %v375
    %v377 = vand.u32 %v230, 4294901760
    %v378 = vsub.f32 %v230, %v377
    %v379 = vand.u32 %v378, 4294901760
    %v380 = vsub.f32 %v378, %v379
    %v381 = vand.u32 %v380, 4294901760
    %382 = vmatpush.msra.mxu0 %v381
    %v383 = vand.u32 %v228, 4294901760
    %v384 = vsub.f32 %v228, %v383
    %v385 = vand.u32 %v384, 4294901760
    %v386 = vsub.f32 %v384, %v385
    %v387 = vand.u32 %v386, 4294901760
    %388 = vmatpush.msra.mxu0 %v387
    %v389 = vand.u32 %v226, 4294901760
    %v390 = vsub.f32 %v226, %v389
    %v391 = vand.u32 %v390, 4294901760
    %v392 = vsub.f32 %v390, %v391
    %v393 = vand.u32 %v392, 4294901760
    %394 = vmatpush.msra.mxu0 %v393
    %v395 = vand.u32 %v224, 4294901760
    %v396 = vsub.f32 %v224, %v395
    %v397 = vand.u32 %v396, 4294901760
    %v398 = vsub.f32 %v396, %v397
    %v399 = vand.u32 %v398, 4294901760
    %400 = vmatpush.msra.mxu0 %v399
    %v401 = vand.u32 %v222, 4294901760
    %v402 = vsub.f32 %v222, %v401
    %v403 = vand.u32 %v402, 4294901760
    %v404 = vsub.f32 %v402, %v403
    %v405 = vand.u32 %v404, 4294901760
    %406 = vmatpush.msra.mxu0 %v405
    %v407 = vand.u32 %v220, 4294901760
    %v408 = vsub.f32 %v220, %v407
    %v409 = vand.u32 %v408, 4294901760
    %v410 = vsub.f32 %v408, %v409
    %v411 = vand.u32 %v410, 4294901760
    %412 = vmatpush.msra.mxu0 %v411
    %v413 = vand.u32 %v218, 4294901760
    %v414 = vsub.f32 %v218, %v413
    %v415 = vand.u32 %v414, 4294901760
    %v416 = vsub.f32 %v414, %v415
    %v417 = vand.u32 %v416, 4294901760
    %418 = vmatpush.msra.mxu0 %v417
    %v419 = vand.u32 %v151, 4294901760
    %420 = vmatmul.f32.gmra.mxu0 %v419
    %v421 = vpop.f32.mrf.mxu0
    %v422 = vadd.f32 %v321, %v421
    %423 = vdwg.mxu0
    %v424 = vand.u32 %v248, 4294901760
    %v425 = vsub.f32 %v248, %v424
    %426 = vmatpush.msra.mxu0 %v425
    %v427 = vand.u32 %v246, 4294901760
    %v428 = vsub.f32 %v246, %v427
    %429 = vmatpush.msra.mxu0 %v428
    %v430 = vand.u32 %v244, 4294901760
    %v431 = vsub.f32 %v244, %v430
    %432 = vmatpush.msra.mxu0 %v431
    %v433 = vand.u32 %v242, 4294901760
    %v434 = vsub.f32 %v242, %v433
    %435 = vmatpush.msra.mxu0 %v434
    %v436 = vand.u32 %v240, 4294901760
    %v437 = vsub.f32 %v240, %v436
    %438 = vmatpush.msra.mxu0 %v437
    %v439 = vand.u32 %v238, 4294901760
    %v440 = vsub.f32 %v238, %v439
    %441 = vmatpush.msra.mxu0 %v440
    %v442 = vand.u32 %v236, 4294901760
    %v443 = vsub.f32 %v236, %v442
    %444 = vmatpush.msra.mxu0 %v443
    %v445 = vand.u32 %v234, 4294901760
    %v446 = vsub.f32 %v234, %v445
    %447 = vmatpush.msra.mxu0 %v446
    %v448 = vand.u32 %v232, 4294901760
    %v449 = vsub.f32 %v232, %v448
    %450 = vmatpush.msra.mxu0 %v449
    %v451 = vand.u32 %v230, 4294901760
    %v452 = vsub.f32 %v230, %v451
    %453 = vmatpush.msra.mxu0 %v452
    %v454 = vand.u32 %v228, 4294901760
    %v455 = vsub.f32 %v228, %v454
    %456 = vmatpush.msra.mxu0 %v455
    %v457 = vand.u32 %v226, 4294901760
    %v458 = vsub.f32 %v226, %v457
    %459 = vmatpush.msra.mxu0 %v458
    %v460 = vand.u32 %v224, 4294901760
    %v461 = vsub.f32 %v224, %v460
    %462 = vmatpush.msra.mxu0 %v461
    %v463 = vand.u32 %v222, 4294901760
    %v464 = vsub.f32 %v222, %v463
    %465 = vmatpush.msra.mxu0 %v464
    %v466 = vand.u32 %v220, 4294901760
    %v467 = vsub.f32 %v220, %v466
    %468 = vmatpush.msra.mxu0 %v467
    %v469 = vand.u32 %v218, 4294901760
    %v470 = vsub.f32 %v218, %v469
    %471 = vmatpush.msra.mxu0 %v470
    %v472 = vand.u32 %v151, 4294901760
    %v473 = vsub.f32 %v151, %v472
    %474 = vmatmul.f32.gmra.mxu0 %v473
    %v475 = vpop.f32.mrf.mxu0
    %v476 = vadd.f32 %v422, %v475
    %477 = vdwg.mxu0
    %v478 = vand.u32 %v248, 4294901760
    %479 = vmatpush.msra.mxu0 %v478
    %v480 = vand.u32 %v246, 4294901760
    %481 = vmatpush.msra.mxu0 %v480
    %v482 = vand.u32 %v244, 4294901760
    %483 = vmatpush.msra.mxu0 %v482
    %v484 = vand.u32 %v242, 4294901760
    %485 = vmatpush.msra.mxu0 %v484
    %v486 = vand.u32 %v240, 4294901760
    %487 = vmatpush.msra.mxu0 %v486
    %v488 = vand.u32 %v238, 4294901760
    %489 = vmatpush.msra.mxu0 %v488
    %v490 = vand.u32 %v236, 4294901760
    %491 = vmatpush.msra.mxu0 %v490
    %v492 = vand.u32 %v234, 4294901760
    %493 = vmatpush.msra.mxu0 %v492
    %v494 = vand.u32 %v232, 4294901760
    %495 = vmatpush.msra.mxu0 %v494
    %v496 = vand.u32 %v230, 4294901760
    %497 = vmatpush.msra.mxu0 %v496
    %v498 = vand.u32 %v228, 4294901760
    %499 = vmatpush.msra.mxu0 %v498
    %v500 = vand.u32 %v226, 4294901760
    %501 = vmatpush.msra.mxu0 %v500
    %v502 = vand.u32 %v224, 4294901760
    %503 = vmatpush.msra.mxu0 %v502
    %v504 = vand.u32 %v222, 4294901760
    %505 = vmatpush.msra.mxu0 %v504
    %v506 = vand.u32 %v220, 4294901760
    %507 = vmatpush.msra.mxu0 %v506
    %v508 = vand.u32 %v218, 4294901760
    %509 = vmatpush.msra.mxu0 %v508
    %v510 = vand.u32 %v151, 4294901760
    %v511 = vsub.f32 %v151, %v510
    %v512 = vand.u32 %v511, 4294901760
    %513 = vmatmul.f32.gmra.mxu0 %v512
    %v514 = vpop.f32.mrf.mxu0
    %v515 = vadd.f32 %v476, %v514
    %516 = vdwg.mxu0
    %v517 = vand.u32 %v248, 4294901760
    %v518 = vsub.f32 %v248, %v517
    %v519 = vand.u32 %v518, 4294901760
    %520 = vmatpush.msra.mxu0 %v519
    %v521 = vand.u32 %v246, 4294901760
    %v522 = vsub.f32 %v246, %v521
    %v523 = vand.u32 %v522, 4294901760
    %524 = vmatpush.msra.mxu0 %v523
    %v525 = vand.u32 %v244, 4294901760
    %v526 = vsub.f32 %v244, %v525
    %v527 = vand.u32 %v526, 4294901760
    %528 = vmatpush.msra.mxu0 %v527
    %v529 = vand.u32 %v242, 4294901760
    %v530 = vsub.f32 %v242, %v529
    %v531 = vand.u32 %v530, 4294901760
    %532 = vmatpush.msra.mxu0 %v531
    %v533 = vand.u32 %v240, 4294901760
    %v534 = vsub.f32 %v240, %v533
    %v535 = vand.u32 %v534, 4294901760
    %536 = vmatpush.msra.mxu0 %v535
    %v537 = vand.u32 %v238, 4294901760
    %v538 = vsub.f32 %v238, %v537
    %v539 = vand.u32 %v538, 4294901760
    %540 = vmatpush.msra.mxu0 %v539
    %v541 = vand.u32 %v236, 4294901760
    %v542 = vsub.f32 %v236, %v541
    %v543 = vand.u32 %v542, 4294901760
    %544 = vmatpush.msra.mxu0 %v543
    %v545 = vand.u32 %v234, 4294901760
    %v546 = vsub.f32 %v234, %v545
    %v547 = vand.u32 %v546, 4294901760
    %548 = vmatpush.msra.mxu0 %v547
    %v549 = vand.u32 %v232, 4294901760
    %v550 = vsub.f32 %v232, %v549
    %v551 = vand.u32 %v550, 4294901760
    %552 = vmatpush.msra.mxu0 %v551
    %v553 = vand.u32 %v230, 4294901760
    %v554 = vsub.f32 %v230, %v553
    %v555 = vand.u32 %v554, 4294901760
    %556 = vmatpush.msra.mxu0 %v555
    %v557 = vand.u32 %v228, 4294901760
    %v558 = vsub.f32 %v228, %v557
    %v559 = vand.u32 %v558, 4294901760
    %560 = vmatpush.msra.mxu0 %v559
    %v561 = vand.u32 %v226, 4294901760
    %v562 = vsub.f32 %v226, %v561
    %v563 = vand.u32 %v562, 4294901760
    %564 = vmatpush.msra.mxu0 %v563
    %v565 = vand.u32 %v224, 4294901760
    %v566 = vsub.f32 %v224, %v565
    %v567 = vand.u32 %v566, 4294901760
    %568 = vmatpush.msra.mxu0 %v567
    %v569 = vand.u32 %v222, 4294901760
    %v570 = vsub.f32 %v222, %v569
    %v571 = vand.u32 %v570, 4294901760
    %572 = vmatpush.msra.mxu0 %v571
    %v573 = vand.u32 %v220, 4294901760
    %v574 = vsub.f32 %v220, %v573
    %v575 = vand.u32 %v574, 4294901760
    %576 = vmatpush.msra.mxu0 %v575
    %v577 = vand.u32 %v218, 4294901760
    %v578 = vsub.f32 %v218, %v577
    %v579 = vand.u32 %v578, 4294901760
    %580 = vmatpush.msra.mxu0 %v579
    %v581 = vand.u32 %v151, 4294901760
    %582 = vmatmul.f32.gmra.mxu0 %v581
    %v583 = vpop.f32.mrf.mxu0
    %v584 = vadd.f32 %v515, %v583
    %585 = vdwg.mxu0
    %v586 = vand.u32 %v248, 4294901760
    %587 = vmatpush.msra.mxu0 %v586
    %v588 = vand.u32 %v246, 4294901760
    %589 = vmatpush.msra.mxu0 %v588
    %v590 = vand.u32 %v244, 4294901760
    %591 = vmatpush.msra.mxu0 %v590
    %v592 = vand.u32 %v242, 4294901760
    %593 = vmatpush.msra.mxu0 %v592
    %v594 = vand.u32 %v240, 4294901760
    %595 = vmatpush.msra.mxu0 %v594
    %v596 = vand.u32 %v238, 4294901760
    %597 = vmatpush.msra.mxu0 %v596
    %v598 = vand.u32 %v236, 4294901760
    %599 = vmatpush.msra.mxu0 %v598
    %v600 = vand.u32 %v234, 4294901760
    %601 = vmatpush.msra.mxu0 %v600
    %v602 = vand.u32 %v232, 4294901760
    %603 = vmatpush.msra.mxu0 %v602
    %v604 = vand.u32 %v230, 4294901760
    %605 = vmatpush.msra.mxu0 %v604
    %v606 = vand.u32 %v228, 4294901760
    %607 = vmatpush.msra.mxu0 %v606
    %v608 = vand.u32 %v226, 4294901760
    %609 = vmatpush.msra.mxu0 %v608
    %v610 = vand.u32 %v224, 4294901760
    %611 = vmatpush.msra.mxu0 %v610
    %v612 = vand.u32 %v222, 4294901760
    %613 = vmatpush.msra.mxu0 %v612
    %v614 = vand.u32 %v220, 4294901760
    %615 = vmatpush.msra.mxu0 %v614
    %v616 = vand.u32 %v218, 4294901760
    %617 = vmatpush.msra.mxu0 %v616
    %v618 = vand.u32 %v151, 4294901760
    %619 = vmatmul.f32.gmra.mxu0 %v618
    %v620 = vpop.f32.mrf.mxu0
    %v621 = vadd.f32 %v584, %v620
    %622 = vdwg.mxu0
    %v623 = vand.u32 %v280, 4294901760
    %624 = vmatpush.msra.mxu0 %v623
    %v625 = vand.u32 %v278, 4294901760
    %626 = vmatpush.msra.mxu0 %v625
    %v627 = vand.u32 %v276, 4294901760
    %628 = vmatpush.msra.mxu0 %v627
    %v629 = vand.u32 %v274, 4294901760
    %630 = vmatpush.msra.mxu0 %v629
    %v631 = vand.u32 %v272, 4294901760
    %632 = vmatpush.msra.mxu0 %v631
    %v633 = vand.u32 %v270, 4294901760
    %634 = vmatpush.msra.mxu0 %v633
    %v635 = vand.u32 %v268, 4294901760
    %636 = vmatpush.msra.mxu0 %v635
    %v637 = vand.u32 %v266, 4294901760
    %638 = vmatpush.msra.mxu0 %v637
    %v639 = vand.u32 %v264, 4294901760
    %640 = vmatpush.msra.mxu0 %v639
    %v641 = vand.u32 %v262, 4294901760
    %642 = vmatpush.msra.mxu0 %v641
    %v643 = vand.u32 %v260, 4294901760
    %644 = vmatpush.msra.mxu0 %v643
    %v645 = vand.u32 %v258, 4294901760
    %646 = vmatpush.msra.mxu0 %v645
    %v647 = vand.u32 %v256, 4294901760
    %648 = vmatpush.msra.mxu0 %v647
    %v649 = vand.u32 %v254, 4294901760
    %650 = vmatpush.msra.mxu0 %v649
    %v651 = vand.u32 %v252, 4294901760
    %652 = vmatpush.msra.mxu0 %v651
    %v653 = vand.u32 %v250, 4294901760
    %654 = vmatpush.msra.mxu0 %v653
    %v655 = vand.u32 %v152, 4294901760
    %v656 = vsub.f32 %v152, %v655
    %v657 = vand.u32 %v656, 4294901760
    %v658 = vsub.f32 %v656, %v657
    %v659 = vand.u32 %v658, 4294901760
    %660 = vmatmul.f32.gmra.mxu0 %v659
    %v661 = vpop.f32.mrf.mxu0
    %v662 = vadd.f32 %v621, %v661
    %663 = vdwg.mxu0
    %v664 = vand.u32 %v280, 4294901760
    %v665 = vsub.f32 %v280, %v664
    %v666 = vand.u32 %v665, 4294901760
    %v667 = vsub.f32 %v665, %v666
    %v668 = vand.u32 %v667, 4294901760
    %669 = vmatpush.msra.mxu0 %v668
    %v670 = vand.u32 %v278, 4294901760
    %v671 = vsub.f32 %v278, %v670
    %v672 = vand.u32 %v671, 4294901760
    %v673 = vsub.f32 %v671, %v672
    %v674 = vand.u32 %v673, 4294901760
    %675 = vmatpush.msra.mxu0 %v674
    %v676 = vand.u32 %v276, 4294901760
    %v677 = vsub.f32 %v276, %v676
    %v678 = vand.u32 %v677, 4294901760
    %v679 = vsub.f32 %v677, %v678
    %v680 = vand.u32 %v679, 4294901760
    %681 = vmatpush.msra.mxu0 %v680
    %v682 = vand.u32 %v274, 4294901760
    %v683 = vsub.f32 %v274, %v682
    %v684 = vand.u32 %v683, 4294901760
    %v685 = vsub.f32 %v683, %v684
    %v686 = vand.u32 %v685, 4294901760
    %687 = vmatpush.msra.mxu0 %v686
    %v688 = vand.u32 %v272, 4294901760
    %v689 = vsub.f32 %v272, %v688
    %v690 = vand.u32 %v689, 4294901760
    %v691 = vsub.f32 %v689, %v690
    %v692 = vand.u32 %v691, 4294901760
    %693 = vmatpush.msra.mxu0 %v692
    %v694 = vand.u32 %v270, 4294901760
    %v695 = vsub.f32 %v270, %v694
    %v696 = vand.u32 %v695, 4294901760
    %v697 = vsub.f32 %v695, %v696
    %v698 = vand.u32 %v697, 4294901760
    %699 = vmatpush.msra.mxu0 %v698
    %v700 = vand.u32 %v268, 4294901760
    %v701 = vsub.f32 %v268, %v700
    %v702 = vand.u32 %v701, 4294901760
    %v703 = vsub.f32 %v701, %v702
    %v704 = vand.u32 %v703, 4294901760
    %705 = vmatpush.msra.mxu0 %v704
    %v706 = vand.u32 %v266, 4294901760
    %v707 = vsub.f32 %v266, %v706
    %v708 = vand.u32 %v707, 4294901760
    %v709 = vsub.f32 %v707, %v708
    %v710 = vand.u32 %v709, 4294901760
    %711 = vmatpush.msra.mxu0 %v710
    %v712 = vand.u32 %v264, 4294901760
    %v713 = vsub.f32 %v264, %v712
    %v714 = vand.u32 %v713, 4294901760
    %v715 = vsub.f32 %v713, %v714
    %v716 = vand.u32 %v715, 4294901760
    %717 = vmatpush.msra.mxu0 %v716
    %v718 = vand.u32 %v262, 4294901760
    %v719 = vsub.f32 %v262, %v718
    %v720 = vand.u32 %v719, 4294901760
    %v721 = vsub.f32 %v719, %v720
    %v722 = vand.u32 %v721, 4294901760
    %723 = vmatpush.msra.mxu0 %v722
    %v724 = vand.u32 %v260, 4294901760
    %v725 = vsub.f32 %v260, %v724
    %v726 = vand.u32 %v725, 4294901760
    %v727 = vsub.f32 %v725, %v726
    %v728 = vand.u32 %v727, 4294901760
    %729 = vmatpush.msra.mxu0 %v728
    %v730 = vand.u32 %v258, 4294901760
    %v731 = vsub.f32 %v258, %v730
    %v732 = vand.u32 %v731, 4294901760
    %v733 = vsub.f32 %v731, %v732
    %v734 = vand.u32 %v733, 4294901760
    %735 = vmatpush.msra.mxu0 %v734
    %v736 = vand.u32 %v256, 4294901760
    %v737 = vsub.f32 %v256, %v736
    %v738 = vand.u32 %v737, 4294901760
    %v739 = vsub.f32 %v737, %v738
    %v740 = vand.u32 %v739, 4294901760
    %741 = vmatpush.msra.mxu0 %v740
    %v742 = vand.u32 %v254, 4294901760
    %v743 = vsub.f32 %v254, %v742
    %v744 = vand.u32 %v743, 4294901760
    %v745 = vsub.f32 %v743, %v744
    %v746 = vand.u32 %v745, 4294901760
    %747 = vmatpush.msra.mxu0 %v746
    %v748 = vand.u32 %v252, 4294901760
    %v749 = vsub.f32 %v252, %v748
    %v750 = vand.u32 %v749, 4294901760
    %v751 = vsub.f32 %v749, %v750
    %v752 = vand.u32 %v751, 4294901760
    %753 = vmatpush.msra.mxu0 %v752
    %v754 = vand.u32 %v250, 4294901760
    %v755 = vsub.f32 %v250, %v754
    %v756 = vand.u32 %v755, 4294901760
    %v757 = vsub.f32 %v755, %v756
    %v758 = vand.u32 %v757, 4294901760
    %759 = vmatpush.msra.mxu0 %v758
    %v760 = vand.u32 %v152, 4294901760
    %761 = vmatmul.f32.gmra.mxu0 %v760
    %v762 = vpop.f32.mrf.mxu0
    %v763 = vadd.f32 %v662, %v762
    %764 = vdwg.mxu0
    %v765 = vand.u32 %v280, 4294901760
    %v766 = vsub.f32 %v280, %v765
    %767 = vmatpush.msra.mxu0 %v766
    %v768 = vand.u32 %v278, 4294901760
    %v769 = vsub.f32 %v278, %v768
    %770 = vmatpush.msra.mxu0 %v769
    %v771 = vand.u32 %v276, 4294901760
    %v772 = vsub.f32 %v276, %v771
    %773 = vmatpush.msra.mxu0 %v772
    %v774 = vand.u32 %v274, 4294901760
    %v775 = vsub.f32 %v274, %v774
    %776 = vmatpush.msra.mxu0 %v775
    %v777 = vand.u32 %v272, 4294901760
    %v778 = vsub.f32 %v272, %v777
    %779 = vmatpush.msra.mxu0 %v778
    %v780 = vand.u32 %v270, 4294901760
    %v781 = vsub.f32 %v270, %v780
    %782 = vmatpush.msra.mxu0 %v781
    %v783 = vand.u32 %v268, 4294901760
    %v784 = vsub.f32 %v268, %v783
    %785 = vmatpush.msra.mxu0 %v784
    %v786 = vand.u32 %v266, 4294901760
    %v787 = vsub.f32 %v266, %v786
    %788 = vmatpush.msra.mxu0 %v787
    %v789 = vand.u32 %v264, 4294901760
    %v790 = vsub.f32 %v264, %v789
    %791 = vmatpush.msra.mxu0 %v790
    %v792 = vand.u32 %v262, 4294901760
    %v793 = vsub.f32 %v262, %v792
    %794 = vmatpush.msra.mxu0 %v793
    %v795 = vand.u32 %v260, 4294901760
    %v796 = vsub.f32 %v260, %v795
    %797 = vmatpush.msra.mxu0 %v796
    %v798 = vand.u32 %v258, 4294901760
    %v799 = vsub.f32 %v258, %v798
    %800 = vmatpush.msra.mxu0 %v799
    %v801 = vand.u32 %v256, 4294901760
    %v802 = vsub.f32 %v256, %v801
    %803 = vmatpush.msra.mxu0 %v802
    %v804 = vand.u32 %v254, 4294901760
    %v805 = vsub.f32 %v254, %v804
    %806 = vmatpush.msra.mxu0 %v805
    %v807 = vand.u32 %v252, 4294901760
    %v808 = vsub.f32 %v252, %v807
    %809 = vmatpush.msra.mxu0 %v808
    %v810 = vand.u32 %v250, 4294901760
    %v811 = vsub.f32 %v250, %v810
    %812 = vmatpush.msra.mxu0 %v811
    %v813 = vand.u32 %v152, 4294901760
    %v814 = vsub.f32 %v152, %v813
    %815 = vmatmul.f32.gmra.mxu0 %v814
    %v816 = vpop.f32.mrf.mxu0
    %v817 = vadd.f32 %v763, %v816
    %818 = vdwg.mxu0
    %v819 = vand.u32 %v280, 4294901760
    %820 = vmatpush.msra.mxu0 %v819
    %v821 = vand.u32 %v278, 4294901760
    %822 = vmatpush.msra.mxu0 %v821
    %v823 = vand.u32 %v276, 4294901760
    %824 = vmatpush.msra.mxu0 %v823
    %v825 = vand.u32 %v274, 4294901760
    %826 = vmatpush.msra.mxu0 %v825
    %v827 = vand.u32 %v272, 4294901760
    %828 = vmatpush.msra.mxu0 %v827
    %v829 = vand.u32 %v270, 4294901760
    %830 = vmatpush.msra.mxu0 %v829
    %v831 = vand.u32 %v268, 4294901760
    %832 = vmatpush.msra.mxu0 %v831
    %v833 = vand.u32 %v266, 4294901760
    %834 = vmatpush.msra.mxu0 %v833
    %v835 = vand.u32 %v264, 4294901760
    %836 = vmatpush.msra.mxu0 %v835
    %v837 = vand.u32 %v262, 4294901760
    %838 = vmatpush.msra.mxu0 %v837
    %v839 = vand.u32 %v260, 4294901760
    %840 = vmatpush.msra.mxu0 %v839
    %v841 = vand.u32 %v258, 4294901760
    %842 = vmatpush.msra.mxu0 %v841
    %v843 = vand.u32 %v256, 4294901760
    %844 = vmatpush.msra.mxu0 %v843
    %v845 = vand.u32 %v254, 4294901760
    %846 = vmatpush.msra.mxu0 %v845
    %v847 = vand.u32 %v252, 4294901760
    %848 = vmatpush.msra.mxu0 %v847
    %v849 = vand.u32 %v250, 4294901760
    %850 = vmatpush.msra.mxu0 %v849
    %v851 = vand.u32 %v152, 4294901760
    %v852 = vsub.f32 %v152, %v851
    %v853 = vand.u32 %v852, 4294901760
    %854 = vmatmul.f32.gmra.mxu0 %v853
    %v855 = vpop.f32.mrf.mxu0
    %v856 = vadd.f32 %v817, %v855
    %857 = vdwg.mxu0
    %v858 = vand.u32 %v280, 4294901760
    %v859 = vsub.f32 %v280, %v858
    %v860 = vand.u32 %v859, 4294901760
    %861 = vmatpush.msra.mxu0 %v860
    %v862 = vand.u32 %v278, 4294901760
    %v863 = vsub.f32 %v278, %v862
    %v864 = vand.u32 %v863, 4294901760
    %865 = vmatpush.msra.mxu0 %v864
    %v866 = vand.u32 %v276, 4294901760
    %v867 = vsub.f32 %v276, %v866
    %v868 = vand.u32 %v867, 4294901760
    %869 = vmatpush.msra.mxu0 %v868
    %v870 = vand.u32 %v274, 4294901760
    %v871 = vsub.f32 %v274, %v870
    %v872 = vand.u32 %v871, 4294901760
    %873 = vmatpush.msra.mxu0 %v872
    %v874 = vand.u32 %v272, 4294901760
    %v875 = vsub.f32 %v272, %v874
    %v876 = vand.u32 %v875, 4294901760
    %877 = vmatpush.msra.mxu0 %v876
    %v878 = vand.u32 %v270, 4294901760
    %v879 = vsub.f32 %v270, %v878
    %v880 = vand.u32 %v879, 4294901760
    %881 = vmatpush.msra.mxu0 %v880
    %v882 = vand.u32 %v268, 4294901760
    %v883 = vsub.f32 %v268, %v882
    %v884 = vand.u32 %v883, 4294901760
    %885 = vmatpush.msra.mxu0 %v884
    %v886 = vand.u32 %v266, 4294901760
    %v887 = vsub.f32 %v266, %v886
    %v888 = vand.u32 %v887, 4294901760
    %889 = vmatpush.msra.mxu0 %v888
    %v890 = vand.u32 %v264, 4294901760
    %v891 = vsub.f32 %v264, %v890
    %v892 = vand.u32 %v891, 4294901760
    %893 = vmatpush.msra.mxu0 %v892
    %v894 = vand.u32 %v262, 4294901760
    %v895 = vsub.f32 %v262, %v894
    %v896 = vand.u32 %v895, 4294901760
    %897 = vmatpush.msra.mxu0 %v896
    %v898 = vand.u32 %v260, 4294901760
    %v899 = vsub.f32 %v260, %v898
    %v900 = vand.u32 %v899, 4294901760
    %901 = vmatpush.msra.mxu0 %v900
    %v902 = vand.u32 %v258, 4294901760
    %v903 = vsub.f32 %v258, %v902
    %v904 = vand.u32 %v903, 4294901760
    %905 = vmatpush.msra.mxu0 %v904
    %v906 = vand.u32 %v256, 4294901760
    %v907 = vsub.f32 %v256, %v906
    %v908 = vand.u32 %v907, 4294901760
    %909 = vmatpush.msra.mxu0 %v908
    %v910 = vand.u32 %v254, 4294901760
    %v911 = vsub.f32 %v254, %v910
    %v912 = vand.u32 %v911, 4294901760
    %913 = vmatpush.msra.mxu0 %v912
    %v914 = vand.u32 %v252, 4294901760
    %v915 = vsub.f32 %v252, %v914
    %v916 = vand.u32 %v915, 4294901760
    %917 = vmatpush.msra.mxu0 %v916
    %v918 = vand.u32 %v250, 4294901760
    %v919 = vsub.f32 %v250, %v918
    %v920 = vand.u32 %v919, 4294901760
    %921 = vmatpush.msra.mxu0 %v920
    %v922 = vand.u32 %v152, 4294901760
    %923 = vmatmul.f32.gmra.mxu0 %v922
    %v924 = vpop.f32.mrf.mxu0
    %v925 = vadd.f32 %v856, %v924
    %926 = vdwg.mxu0
    %v927 = vand.u32 %v280, 4294901760
    %928 = vmatpush.msra.mxu0 %v927
    %v929 = vand.u32 %v278, 4294901760
    %930 = vmatpush.msra.mxu0 %v929
    %v931 = vand.u32 %v276, 4294901760
    %932 = vmatpush.msra.mxu0 %v931
    %v933 = vand.u32 %v274, 4294901760
    %934 = vmatpush.msra.mxu0 %v933
    %v935 = vand.u32 %v272, 4294901760
    %936 = vmatpush.msra.mxu0 %v935
    %v937 = vand.u32 %v270, 4294901760
    %938 = vmatpush.msra.mxu0 %v937
    %v939 = vand.u32 %v268, 4294901760
    %940 = vmatpush.msra.mxu0 %v939
    %v941 = vand.u32 %v266, 4294901760
    %942 = vmatpush.msra.mxu0 %v941
    %v943 = vand.u32 %v264, 4294901760
    %944 = vmatpush.msra.mxu0 %v943
    %v945 = vand.u32 %v262, 4294901760
    %946 = vmatpush.msra.mxu0 %v945
    %v947 = vand.u32 %v260, 4294901760
    %948 = vmatpush.msra.mxu0 %v947
    %v949 = vand.u32 %v258, 4294901760
    %950 = vmatpush.msra.mxu0 %v949
    %v951 = vand.u32 %v256, 4294901760
    %952 = vmatpush.msra.mxu0 %v951
    %v953 = vand.u32 %v254, 4294901760
    %954 = vmatpush.msra.mxu0 %v953
    %v955 = vand.u32 %v252, 4294901760
    %956 = vmatpush.msra.mxu0 %v955
    %v957 = vand.u32 %v250, 4294901760
    %958 = vmatpush.msra.mxu0 %v957
    %v959 = vand.u32 %v152, 4294901760
    %960 = vmatmul.f32.gmra.mxu0 %v959
    %v961 = vpop.f32.mrf.mxu0
    %v962 = vadd.f32 %v925, %v961
    %963 = vdwg.mxu0
    %v964 = vand.u32 %v249, 4294901760
    %965 = vmatpush.msra.mxu0 %v964
    %v966 = vand.u32 %v247, 4294901760
    %967 = vmatpush.msra.mxu0 %v966
    %v968 = vand.u32 %v245, 4294901760
    %969 = vmatpush.msra.mxu0 %v968
    %v970 = vand.u32 %v243, 4294901760
    %971 = vmatpush.msra.mxu0 %v970
    %v972 = vand.u32 %v241, 4294901760
    %973 = vmatpush.msra.mxu0 %v972
    %v974 = vand.u32 %v239, 4294901760
    %975 = vmatpush.msra.mxu0 %v974
    %v976 = vand.u32 %v237, 4294901760
    %977 = vmatpush.msra.mxu0 %v976
    %v978 = vand.u32 %v235, 4294901760
    %979 = vmatpush.msra.mxu0 %v978
    %v980 = vand.u32 %v233, 4294901760
    %981 = vmatpush.msra.mxu0 %v980
    %v982 = vand.u32 %v231, 4294901760
    %983 = vmatpush.msra.mxu0 %v982
    %v984 = vand.u32 %v229, 4294901760
    %985 = vmatpush.msra.mxu0 %v984
    %v986 = vand.u32 %v227, 4294901760
    %987 = vmatpush.msra.mxu0 %v986
    %v988 = vand.u32 %v225, 4294901760
    %989 = vmatpush.msra.mxu0 %v988
    %v990 = vand.u32 %v223, 4294901760
    %991 = vmatpush.msra.mxu0 %v990
    %v992 = vand.u32 %v221, 4294901760
    %993 = vmatpush.msra.mxu0 %v992
    %v994 = vand.u32 %v219, 4294901760
    %995 = vmatpush.msra.mxu0 %v994
    %v996 = vand.u32 %v151, 4294901760
    %v997 = vsub.f32 %v151, %v996
    %v998 = vand.u32 %v997, 4294901760
    %v999 = vsub.f32 %v997, %v998
    %v1000 = vand.u32 %v999, 4294901760
    %1001 = vmatmul.f32.gmra.mxu0 %v1000
    %v1002 = vpop.f32.mrf.mxu0
    %v1003 = vadd.f32 0.0, %v1002
    %1004 = vdwg.mxu0
    %v1005 = vand.u32 %v249, 4294901760
    %v1006 = vsub.f32 %v249, %v1005
    %v1007 = vand.u32 %v1006, 4294901760
    %v1008 = vsub.f32 %v1006, %v1007
    %v1009 = vand.u32 %v1008, 4294901760
    %1010 = vmatpush.msra.mxu0 %v1009
    %v1011 = vand.u32 %v247, 4294901760
    %v1012 = vsub.f32 %v247, %v1011
    %v1013 = vand.u32 %v1012, 4294901760
    %v1014 = vsub.f32 %v1012, %v1013
    %v1015 = vand.u32 %v1014, 4294901760
    %1016 = vmatpush.msra.mxu0 %v1015
    %v1017 = vand.u32 %v245, 4294901760
    %v1018 = vsub.f32 %v245, %v1017
    %v1019 = vand.u32 %v1018, 4294901760
    %v1020 = vsub.f32 %v1018, %v1019
    %v1021 = vand.u32 %v1020, 4294901760
    %1022 = vmatpush.msra.mxu0 %v1021
    %v1023 = vand.u32 %v243, 4294901760
    %v1024 = vsub.f32 %v243, %v1023
    %v1025 = vand.u32 %v1024, 4294901760
    %v1026 = vsub.f32 %v1024, %v1025
    %v1027 = vand.u32 %v1026, 4294901760
    %1028 = vmatpush.msra.mxu0 %v1027
    %v1029 = vand.u32 %v241, 4294901760
    %v1030 = vsub.f32 %v241, %v1029
    %v1031 = vand.u32 %v1030, 4294901760
    %v1032 = vsub.f32 %v1030, %v1031
    %v1033 = vand.u32 %v1032, 4294901760
    %1034 = vmatpush.msra.mxu0 %v1033
    %v1035 = vand.u32 %v239, 4294901760
    %v1036 = vsub.f32 %v239, %v1035
    %v1037 = vand.u32 %v1036, 4294901760
    %v1038 = vsub.f32 %v1036, %v1037
    %v1039 = vand.u32 %v1038, 4294901760
    %1040 = vmatpush.msra.mxu0 %v1039
    %v1041 = vand.u32 %v237, 4294901760
    %v1042 = vsub.f32 %v237, %v1041
    %v1043 = vand.u32 %v1042, 4294901760
    %v1044 = vsub.f32 %v1042, %v1043
    %v1045 = vand.u32 %v1044, 4294901760
    %1046 = vmatpush.msra.mxu0 %v1045
    %v1047 = vand.u32 %v235, 4294901760
    %v1048 = vsub.f32 %v235, %v1047
    %v1049 = vand.u32 %v1048, 4294901760
    %v1050 = vsub.f32 %v1048, %v1049
    %v1051 = vand.u32 %v1050, 4294901760
    %1052 = vmatpush.msra.mxu0 %v1051
    %v1053 = vand.u32 %v233, 4294901760
    %v1054 = vsub.f32 %v233, %v1053
    %v1055 = vand.u32 %v1054, 4294901760
    %v1056 = vsub.f32 %v1054, %v1055
    %v1057 = vand.u32 %v1056, 4294901760
    %1058 = vmatpush.msra.mxu0 %v1057
    %v1059 = vand.u32 %v231, 4294901760
    %v1060 = vsub.f32 %v231, %v1059
    %v1061 = vand.u32 %v1060, 4294901760
    %v1062 = vsub.f32 %v1060, %v1061
    %v1063 = vand.u32 %v1062, 4294901760
    %1064 = vmatpush.msra.mxu0 %v1063
    %v1065 = vand.u32 %v229, 4294901760
    %v1066 = vsub.f32 %v229, %v1065
    %v1067 = vand.u32 %v1066, 4294901760
    %v1068 = vsub.f32 %v1066, %v1067
    %v1069 = vand.u32 %v1068, 4294901760
    %1070 = vmatpush.msra.mxu0 %v1069
    %v1071 = vand.u32 %v227, 4294901760
    %v1072 = vsub.f32 %v227, %v1071
    %v1073 = vand.u32 %v1072, 4294901760
    %v1074 = vsub.f32 %v1072, %v1073
    %v1075 = vand.u32 %v1074, 4294901760
    %1076 = vmatpush.msra.mxu0 %v1075
    %v1077 = vand.u32 %v225, 4294901760
    %v1078 = vsub.f32 %v225, %v1077
    %v1079 = vand.u32 %v1078, 4294901760
    %v1080 = vsub.f32 %v1078, %v1079
    %v1081 = vand.u32 %v1080, 4294901760
    %1082 = vmatpush.msra.mxu0 %v1081
    %v1083 = vand.u32 %v223, 4294901760
    %v1084 = vsub.f32 %v223, %v1083
    %v1085 = vand.u32 %v1084, 4294901760
    %v1086 = vsub.f32 %v1084, %v1085
    %v1087 = vand.u32 %v1086, 4294901760
    %1088 = vmatpush.msra.mxu0 %v1087
    %v1089 = vand.u32 %v221, 4294901760
    %v1090 = vsub.f32 %v221, %v1089
    %v1091 = vand.u32 %v1090, 4294901760
    %v1092 = vsub.f32 %v1090, %v1091
    %v1093 = vand.u32 %v1092, 4294901760
    %1094 = vmatpush.msra.mxu0 %v1093
    %v1095 = vand.u32 %v219, 4294901760
    %v1096 = vsub.f32 %v219, %v1095
    %v1097 = vand.u32 %v1096, 4294901760
    %v1098 = vsub.f32 %v1096, %v1097
    %v1099 = vand.u32 %v1098, 4294901760
    %1100 = vmatpush.msra.mxu0 %v1099
    %v1101 = vand.u32 %v151, 4294901760
    %1102 = vmatmul.f32.gmra.mxu0 %v1101
    %v1103 = vpop.f32.mrf.mxu0
    %v1104 = vadd.f32 %v1003, %v1103
    %1105 = vdwg.mxu0
    %v1106 = vand.u32 %v249, 4294901760
    %v1107 = vsub.f32 %v249, %v1106
    %1108 = vmatpush.msra.mxu0 %v1107
    %v1109 = vand.u32 %v247, 4294901760
    %v1110 = vsub.f32 %v247, %v1109
    %1111 = vmatpush.msra.mxu0 %v1110
    %v1112 = vand.u32 %v245, 4294901760
    %v1113 = vsub.f32 %v245, %v1112
    %1114 = vmatpush.msra.mxu0 %v1113
    %v1115 = vand.u32 %v243, 4294901760
    %v1116 = vsub.f32 %v243, %v1115
    %1117 = vmatpush.msra.mxu0 %v1116
    %v1118 = vand.u32 %v241, 4294901760
    %v1119 = vsub.f32 %v241, %v1118
    %1120 = vmatpush.msra.mxu0 %v1119
    %v1121 = vand.u32 %v239, 4294901760
    %v1122 = vsub.f32 %v239, %v1121
    %1123 = vmatpush.msra.mxu0 %v1122
    %v1124 = vand.u32 %v237, 4294901760
    %v1125 = vsub.f32 %v237, %v1124
    %1126 = vmatpush.msra.mxu0 %v1125
    %v1127 = vand.u32 %v235, 4294901760
    %v1128 = vsub.f32 %v235, %v1127
    %1129 = vmatpush.msra.mxu0 %v1128
    %v1130 = vand.u32 %v233, 4294901760
    %v1131 = vsub.f32 %v233, %v1130
    %1132 = vmatpush.msra.mxu0 %v1131
    %v1133 = vand.u32 %v231, 4294901760
    %v1134 = vsub.f32 %v231, %v1133
    %1135 = vmatpush.msra.mxu0 %v1134
    %v1136 = vand.u32 %v229, 4294901760
    %v1137 = vsub.f32 %v229, %v1136
    %1138 = vmatpush.msra.mxu0 %v1137
    %v1139 = vand.u32 %v227, 4294901760
    %v1140 = vsub.f32 %v227, %v1139
    %1141 = vmatpush.msra.mxu0 %v1140
    %v1142 = vand.u32 %v225, 4294901760
    %v1143 = vsub.f32 %v225, %v1142
    %1144 = vmatpush.msra.mxu0 %v1143
    %v1145 = vand.u32 %v223, 4294901760
    %v1146 = vsub.f32 %v223, %v1145
    %1147 = vmatpush.msra.mxu0 %v1146
    %v1148 = vand.u32 %v221, 4294901760
    %v1149 = vsub.f32 %v221, %v1148
    %1150 = vmatpush.msra.mxu0 %v1149
    %v1151 = vand.u32 %v219, 4294901760
    %v1152 = vsub.f32 %v219, %v1151
    %1153 = vmatpush.msra.mxu0 %v1152
    %v1154 = vand.u32 %v151, 4294901760
    %v1155 = vsub.f32 %v151, %v1154
    %1156 = vmatmul.f32.gmra.mxu0 %v1155
    %v1157 = vpop.f32.mrf.mxu0
    %v1158 = vadd.f32 %v1104, %v1157
    %1159 = vdwg.mxu0
    %v1160 = vand.u32 %v249, 4294901760
    %1161 = vmatpush.msra.mxu0 %v1160
    %v1162 = vand.u32 %v247, 4294901760
    %1163 = vmatpush.msra.mxu0 %v1162
    %v1164 = vand.u32 %v245, 4294901760
    %1165 = vmatpush.msra.mxu0 %v1164
    %v1166 = vand.u32 %v243, 4294901760
    %1167 = vmatpush.msra.mxu0 %v1166
    %v1168 = vand.u32 %v241, 4294901760
    %1169 = vmatpush.msra.mxu0 %v1168
    %v1170 = vand.u32 %v239, 4294901760
    %1171 = vmatpush.msra.mxu0 %v1170
    %v1172 = vand.u32 %v237, 4294901760
    %1173 = vmatpush.msra.mxu0 %v1172
    %v1174 = vand.u32 %v235, 4294901760
    %1175 = vmatpush.msra.mxu0 %v1174
    %v1176 = vand.u32 %v233, 4294901760
    %1177 = vmatpush.msra.mxu0 %v1176
    %v1178 = vand.u32 %v231, 4294901760
    %1179 = vmatpush.msra.mxu0 %v1178
    %v1180 = vand.u32 %v229, 4294901760
    %1181 = vmatpush.msra.mxu0 %v1180
    %v1182 = vand.u32 %v227, 4294901760
    %1183 = vmatpush.msra.mxu0 %v1182
    %v1184 = vand.u32 %v225, 4294901760
    %1185 = vmatpush.msra.mxu0 %v1184
    %v1186 = vand.u32 %v223, 4294901760
    %1187 = vmatpush.msra.mxu0 %v1186
    %v1188 = vand.u32 %v221, 4294901760
    %1189 = vmatpush.msra.mxu0 %v1188
    %v1190 = vand.u32 %v219, 4294901760
    %1191 = vmatpush.msra.mxu0 %v1190
    %v1192 = vand.u32 %v151, 4294901760
    %v1193 = vsub.f32 %v151, %v1192
    %v1194 = vand.u32 %v1193, 4294901760
    %1195 = vmatmul.f32.gmra.mxu0 %v1194
    %v1196 = vpop.f32.mrf.mxu0
    %v1197 = vadd.f32 %v1158, %v1196
    %1198 = vdwg.mxu0
    %v1199 = vand.u32 %v249, 4294901760
    %v1200 = vsub.f32 %v249, %v1199
    %v1201 = vand.u32 %v1200, 4294901760
    %1202 = vmatpush.msra.mxu0 %v1201
    %v1203 = vand.u32 %v247, 4294901760
    %v1204 = vsub.f32 %v247, %v1203
    %v1205 = vand.u32 %v1204, 4294901760
    %1206 = vmatpush.msra.mxu0 %v1205
    %v1207 = vand.u32 %v245, 4294901760
    %v1208 = vsub.f32 %v245, %v1207
    %v1209 = vand.u32 %v1208, 4294901760
    %1210 = vmatpush.msra.mxu0 %v1209
    %v1211 = vand.u32 %v243, 4294901760
    %v1212 = vsub.f32 %v243, %v1211
    %v1213 = vand.u32 %v1212, 4294901760
    %1214 = vmatpush.msra.mxu0 %v1213
    %v1215 = vand.u32 %v241, 4294901760
    %v1216 = vsub.f32 %v241, %v1215
    %v1217 = vand.u32 %v1216, 4294901760
    %1218 = vmatpush.msra.mxu0 %v1217
    %v1219 = vand.u32 %v239, 4294901760
    %v1220 = vsub.f32 %v239, %v1219
    %v1221 = vand.u32 %v1220, 4294901760
    %1222 = vmatpush.msra.mxu0 %v1221
    %v1223 = vand.u32 %v237, 4294901760
    %v1224 = vsub.f32 %v237, %v1223
    %v1225 = vand.u32 %v1224, 4294901760
    %1226 = vmatpush.msra.mxu0 %v1225
    %v1227 = vand.u32 %v235, 4294901760
    %v1228 = vsub.f32 %v235, %v1227
    %v1229 = vand.u32 %v1228, 4294901760
    %1230 = vmatpush.msra.mxu0 %v1229
    %v1231 = vand.u32 %v233, 4294901760
    %v1232 = vsub.f32 %v233, %v1231
    %v1233 = vand.u32 %v1232, 4294901760
    %1234 = vmatpush.msra.mxu0 %v1233
    %v1235 = vand.u32 %v231, 4294901760
    %v1236 = vsub.f32 %v231, %v1235
    %v1237 = vand.u32 %v1236, 4294901760
    %1238 = vmatpush.msra.mxu0 %v1237
    %v1239 = vand.u32 %v229, 4294901760
    %v1240 = vsub.f32 %v229, %v1239
    %v1241 = vand.u32 %v1240, 4294901760
    %1242 = vmatpush.msra.mxu0 %v1241
    %v1243 = vand.u32 %v227, 4294901760
    %v1244 = vsub.f32 %v227, %v1243
    %v1245 = vand.u32 %v1244, 4294901760
    %1246 = vmatpush.msra.mxu0 %v1245
    %v1247 = vand.u32 %v225, 4294901760
    %v1248 = vsub.f32 %v225, %v1247
    %v1249 = vand.u32 %v1248, 4294901760
    %1250 = vmatpush.msra.mxu0 %v1249
    %v1251 = vand.u32 %v223, 4294901760
    %v1252 = vsub.f32 %v223, %v1251
    %v1253 = vand.u32 %v1252, 4294901760
    %1254 = vmatpush.msra.mxu0 %v1253
    %v1255 = vand.u32 %v221, 4294901760
    %v1256 = vsub.f32 %v221, %v1255
    %v1257 = vand.u32 %v1256, 4294901760
    %1258 = vmatpush.msra.mxu0 %v1257
    %v1259 = vand.u32 %v219, 4294901760
    %v1260 = vsub.f32 %v219, %v1259
    %v1261 = vand.u32 %v1260, 4294901760
    %1262 = vmatpush.msra.mxu0 %v1261
    %v1263 = vand.u32 %v151, 4294901760
    %1264 = vmatmul.f32.gmra.mxu0 %v1263
    %v1265 = vpop.f32.mrf.mxu0
    %v1266 = vadd.f32 %v1197, %v1265
    %1267 = vdwg.mxu0
    %v1268 = vand.u32 %v249, 4294901760
    %1269 = vmatpush.msra.mxu0 %v1268
    %v1270 = vand.u32 %v247, 4294901760
    %1271 = vmatpush.msra.mxu0 %v1270
    %v1272 = vand.u32 %v245, 4294901760
    %1273 = vmatpush.msra.mxu0 %v1272
    %v1274 = vand.u32 %v243, 4294901760
    %1275 = vmatpush.msra.mxu0 %v1274
    %v1276 = vand.u32 %v241, 4294901760
    %1277 = vmatpush.msra.mxu0 %v1276
    %v1278 = vand.u32 %v239, 4294901760
    %1279 = vmatpush.msra.mxu0 %v1278
    %v1280 = vand.u32 %v237, 4294901760
    %1281 = vmatpush.msra.mxu0 %v1280
    %v1282 = vand.u32 %v235, 4294901760
    %1283 = vmatpush.msra.mxu0 %v1282
    %v1284 = vand.u32 %v233, 4294901760
    %1285 = vmatpush.msra.mxu0 %v1284
    %v1286 = vand.u32 %v231, 4294901760
    %1287 = vmatpush.msra.mxu0 %v1286
    %v1288 = vand.u32 %v229, 4294901760
    %1289 = vmatpush.msra.mxu0 %v1288
    %v1290 = vand.u32 %v227, 4294901760
    %1291 = vmatpush.msra.mxu0 %v1290
    %v1292 = vand.u32 %v225, 4294901760
    %1293 = vmatpush.msra.mxu0 %v1292
    %v1294 = vand.u32 %v223, 4294901760
    %1295 = vmatpush.msra.mxu0 %v1294
    %v1296 = vand.u32 %v221, 4294901760
    %1297 = vmatpush.msra.mxu0 %v1296
    %v1298 = vand.u32 %v219, 4294901760
    %1299 = vmatpush.msra.mxu0 %v1298
    %v1300 = vand.u32 %v151, 4294901760
    %1301 = vmatmul.f32.gmra.mxu0 %v1300
    %v1302 = vpop.f32.mrf.mxu0
    %v1303 = vadd.f32 %v1266, %v1302
    %1304 = vdwg.mxu0
    %v1305 = vand.u32 %v281, 4294901760
    %1306 = vmatpush.msra.mxu0 %v1305
    %v1307 = vand.u32 %v279, 4294901760
    %1308 = vmatpush.msra.mxu0 %v1307
    %v1309 = vand.u32 %v277, 4294901760
    %1310 = vmatpush.msra.mxu0 %v1309
    %v1311 = vand.u32 %v275, 4294901760
    %1312 = vmatpush.msra.mxu0 %v1311
    %v1313 = vand.u32 %v273, 4294901760
    %1314 = vmatpush.msra.mxu0 %v1313
    %v1315 = vand.u32 %v271, 4294901760
    %1316 = vmatpush.msra.mxu0 %v1315
    %v1317 = vand.u32 %v269, 4294901760
    %1318 = vmatpush.msra.mxu0 %v1317
    %v1319 = vand.u32 %v267, 4294901760
    %1320 = vmatpush.msra.mxu0 %v1319
    %v1321 = vand.u32 %v265, 4294901760
    %1322 = vmatpush.msra.mxu0 %v1321
    %v1323 = vand.u32 %v263, 4294901760
    %1324 = vmatpush.msra.mxu0 %v1323
    %v1325 = vand.u32 %v261, 4294901760
    %1326 = vmatpush.msra.mxu0 %v1325
    %v1327 = vand.u32 %v259, 4294901760
    %1328 = vmatpush.msra.mxu0 %v1327
    %v1329 = vand.u32 %v257, 4294901760
    %1330 = vmatpush.msra.mxu0 %v1329
    %v1331 = vand.u32 %v255, 4294901760
    %1332 = vmatpush.msra.mxu0 %v1331
    %v1333 = vand.u32 %v253, 4294901760
    %1334 = vmatpush.msra.mxu0 %v1333
    %v1335 = vand.u32 %v251, 4294901760
    %1336 = vmatpush.msra.mxu0 %v1335
    %v1337 = vand.u32 %v152, 4294901760
    %v1338 = vsub.f32 %v152, %v1337
    %v1339 = vand.u32 %v1338, 4294901760
    %v1340 = vsub.f32 %v1338, %v1339
    %v1341 = vand.u32 %v1340, 4294901760
    %1342 = vmatmul.f32.gmra.mxu0 %v1341
    %v1343 = vpop.f32.mrf.mxu0
    %v1344 = vadd.f32 %v1303, %v1343
    %1345 = vdwg.mxu0
    %v1346 = vand.u32 %v281, 4294901760
    %v1347 = vsub.f32 %v281, %v1346
    %v1348 = vand.u32 %v1347, 4294901760
    %v1349 = vsub.f32 %v1347, %v1348
    %v1350 = vand.u32 %v1349, 4294901760
    %1351 = vmatpush.msra.mxu0 %v1350
    %v1352 = vand.u32 %v279, 4294901760
    %v1353 = vsub.f32 %v279, %v1352
    %v1354 = vand.u32 %v1353, 4294901760
    %v1355 = vsub.f32 %v1353, %v1354
    %v1356 = vand.u32 %v1355, 4294901760
    %1357 = vmatpush.msra.mxu0 %v1356
    %v1358 = vand.u32 %v277, 4294901760
    %v1359 = vsub.f32 %v277, %v1358
    %v1360 = vand.u32 %v1359, 4294901760
    %v1361 = vsub.f32 %v1359, %v1360
    %v1362 = vand.u32 %v1361, 4294901760
    %1363 = vmatpush.msra.mxu0 %v1362
    %v1364 = vand.u32 %v275, 4294901760
    %v1365 = vsub.f32 %v275, %v1364
    %v1366 = vand.u32 %v1365, 4294901760
    %v1367 = vsub.f32 %v1365, %v1366
    %v1368 = vand.u32 %v1367, 4294901760
    %1369 = vmatpush.msra.mxu0 %v1368
    %v1370 = vand.u32 %v273, 4294901760
    %v1371 = vsub.f32 %v273, %v1370
    %v1372 = vand.u32 %v1371, 4294901760
    %v1373 = vsub.f32 %v1371, %v1372
    %v1374 = vand.u32 %v1373, 4294901760
    %1375 = vmatpush.msra.mxu0 %v1374
    %v1376 = vand.u32 %v271, 4294901760
    %v1377 = vsub.f32 %v271, %v1376
    %v1378 = vand.u32 %v1377, 4294901760
    %v1379 = vsub.f32 %v1377, %v1378
    %v1380 = vand.u32 %v1379, 4294901760
    %1381 = vmatpush.msra.mxu0 %v1380
    %v1382 = vand.u32 %v269, 4294901760
    %v1383 = vsub.f32 %v269, %v1382
    %v1384 = vand.u32 %v1383, 4294901760
    %v1385 = vsub.f32 %v1383, %v1384
    %v1386 = vand.u32 %v1385, 4294901760
    %1387 = vmatpush.msra.mxu0 %v1386
    %v1388 = vand.u32 %v267, 4294901760
    %v1389 = vsub.f32 %v267, %v1388
    %v1390 = vand.u32 %v1389, 4294901760
    %v1391 = vsub.f32 %v1389, %v1390
    %v1392 = vand.u32 %v1391, 4294901760
    %1393 = vmatpush.msra.mxu0 %v1392
    %v1394 = vand.u32 %v265, 4294901760
    %v1395 = vsub.f32 %v265, %v1394
    %v1396 = vand.u32 %v1395, 4294901760
    %v1397 = vsub.f32 %v1395, %v1396
    %v1398 = vand.u32 %v1397, 4294901760
    %1399 = vmatpush.msra.mxu0 %v1398
    %v1400 = vand.u32 %v263, 4294901760
    %v1401 = vsub.f32 %v263, %v1400
    %v1402 = vand.u32 %v1401, 4294901760
    %v1403 = vsub.f32 %v1401, %v1402
    %v1404 = vand.u32 %v1403, 4294901760
    %1405 = vmatpush.msra.mxu0 %v1404
    %v1406 = vand.u32 %v261, 4294901760
    %v1407 = vsub.f32 %v261, %v1406
    %v1408 = vand.u32 %v1407, 4294901760
    %v1409 = vsub.f32 %v1407, %v1408
    %v1410 = vand.u32 %v1409, 4294901760
    %1411 = vmatpush.msra.mxu0 %v1410
    %v1412 = vand.u32 %v259, 4294901760
    %v1413 = vsub.f32 %v259, %v1412
    %v1414 = vand.u32 %v1413, 4294901760
    %v1415 = vsub.f32 %v1413, %v1414
    %v1416 = vand.u32 %v1415, 4294901760
    %1417 = vmatpush.msra.mxu0 %v1416
    %v1418 = vand.u32 %v257, 4294901760
    %v1419 = vsub.f32 %v257, %v1418
    %v1420 = vand.u32 %v1419, 4294901760
    %v1421 = vsub.f32 %v1419, %v1420
    %v1422 = vand.u32 %v1421, 4294901760
    %1423 = vmatpush.msra.mxu0 %v1422
    %v1424 = vand.u32 %v255, 4294901760
    %v1425 = vsub.f32 %v255, %v1424
    %v1426 = vand.u32 %v1425, 4294901760
    %v1427 = vsub.f32 %v1425, %v1426
    %v1428 = vand.u32 %v1427, 4294901760
    %1429 = vmatpush.msra.mxu0 %v1428
    %v1430 = vand.u32 %v253, 4294901760
    %v1431 = vsub.f32 %v253, %v1430
    %v1432 = vand.u32 %v1431, 4294901760
    %v1433 = vsub.f32 %v1431, %v1432
    %v1434 = vand.u32 %v1433, 4294901760
    %1435 = vmatpush.msra.mxu0 %v1434
    %v1436 = vand.u32 %v251, 4294901760
    %v1437 = vsub.f32 %v251, %v1436
    %v1438 = vand.u32 %v1437, 4294901760
    %v1439 = vsub.f32 %v1437, %v1438
    %v1440 = vand.u32 %v1439, 4294901760
    %1441 = vmatpush.msra.mxu0 %v1440
    %v1442 = vand.u32 %v152, 4294901760
    %1443 = vmatmul.f32.gmra.mxu0 %v1442
    %v1444 = vpop.f32.mrf.mxu0
    %v1445 = vadd.f32 %v1344, %v1444
    %1446 = vdwg.mxu0
    %v1447 = vand.u32 %v281, 4294901760
    %v1448 = vsub.f32 %v281, %v1447
    %1449 = vmatpush.msra.mxu0 %v1448
    %v1450 = vand.u32 %v279, 4294901760
    %v1451 = vsub.f32 %v279, %v1450
    %1452 = vmatpush.msra.mxu0 %v1451
    %v1453 = vand.u32 %v277, 4294901760
    %v1454 = vsub.f32 %v277, %v1453
    %1455 = vmatpush.msra.mxu0 %v1454
    %v1456 = vand.u32 %v275, 4294901760
    %v1457 = vsub.f32 %v275, %v1456
    %1458 = vmatpush.msra.mxu0 %v1457
    %v1459 = vand.u32 %v273, 4294901760
    %v1460 = vsub.f32 %v273, %v1459
    %1461 = vmatpush.msra.mxu0 %v1460
    %v1462 = vand.u32 %v271, 4294901760
    %v1463 = vsub.f32 %v271, %v1462
    %1464 = vmatpush.msra.mxu0 %v1463
    %v1465 = vand.u32 %v269, 4294901760
    %v1466 = vsub.f32 %v269, %v1465
    %1467 = vmatpush.msra.mxu0 %v1466
    %v1468 = vand.u32 %v267, 4294901760
    %v1469 = vsub.f32 %v267, %v1468
    %1470 = vmatpush.msra.mxu0 %v1469
    %v1471 = vand.u32 %v265, 4294901760
    %v1472 = vsub.f32 %v265, %v1471
    %1473 = vmatpush.msra.mxu0 %v1472
    %v1474 = vand.u32 %v263, 4294901760
    %v1475 = vsub.f32 %v263, %v1474
    %1476 = vmatpush.msra.mxu0 %v1475
    %v1477 = vand.u32 %v261, 4294901760
    %v1478 = vsub.f32 %v261, %v1477
    %1479 = vmatpush.msra.mxu0 %v1478
    %v1480 = vand.u32 %v259, 4294901760
    %v1481 = vsub.f32 %v259, %v1480
    %1482 = vmatpush.msra.mxu0 %v1481
    %v1483 = vand.u32 %v257, 4294901760
    %v1484 = vsub.f32 %v257, %v1483
    %1485 = vmatpush.msra.mxu0 %v1484
    %v1486 = vand.u32 %v255, 4294901760
    %v1487 = vsub.f32 %v255, %v1486
    %1488 = vmatpush.msra.mxu0 %v1487
    %v1489 = vand.u32 %v253, 4294901760
    %v1490 = vsub.f32 %v253, %v1489
    %1491 = vmatpush.msra.mxu0 %v1490
    %v1492 = vand.u32 %v251, 4294901760
    %v1493 = vsub.f32 %v251, %v1492
    %1494 = vmatpush.msra.mxu0 %v1493
    %v1495 = vand.u32 %v152, 4294901760
    %v1496 = vsub.f32 %v152, %v1495
    %1497 = vmatmul.f32.gmra.mxu0 %v1496
    %v1498 = vpop.f32.mrf.mxu0
    %v1499 = vadd.f32 %v1445, %v1498
    %1500 = vdwg.mxu0
    %v1501 = vand.u32 %v281, 4294901760
    %1502 = vmatpush.msra.mxu0 %v1501
    %v1503 = vand.u32 %v279, 4294901760
    %1504 = vmatpush.msra.mxu0 %v1503
    %v1505 = vand.u32 %v277, 4294901760
    %1506 = vmatpush.msra.mxu0 %v1505
    %v1507 = vand.u32 %v275, 4294901760
    %1508 = vmatpush.msra.mxu0 %v1507
    %v1509 = vand.u32 %v273, 4294901760
    %1510 = vmatpush.msra.mxu0 %v1509
    %v1511 = vand.u32 %v271, 4294901760
    %1512 = vmatpush.msra.mxu0 %v1511
    %v1513 = vand.u32 %v269, 4294901760
    %1514 = vmatpush.msra.mxu0 %v1513
    %v1515 = vand.u32 %v267, 4294901760
    %1516 = vmatpush.msra.mxu0 %v1515
    %v1517 = vand.u32 %v265, 4294901760
    %1518 = vmatpush.msra.mxu0 %v1517
    %v1519 = vand.u32 %v263, 4294901760
    %1520 = vmatpush.msra.mxu0 %v1519
    %v1521 = vand.u32 %v261, 4294901760
    %1522 = vmatpush.msra.mxu0 %v1521
    %v1523 = vand.u32 %v259, 4294901760
    %1524 = vmatpush.msra.mxu0 %v1523
    %v1525 = vand.u32 %v257, 4294901760
    %1526 = vmatpush.msra.mxu0 %v1525
    %v1527 = vand.u32 %v255, 4294901760
    %1528 = vmatpush.msra.mxu0 %v1527
    %v1529 = vand.u32 %v253, 4294901760
    %1530 = vmatpush.msra.mxu0 %v1529
    %v1531 = vand.u32 %v251, 4294901760
    %1532 = vmatpush.msra.mxu0 %v1531
    %v1533 = vand.u32 %v152, 4294901760
    %v1534 = vsub.f32 %v152, %v1533
    %v1535 = vand.u32 %v1534, 4294901760
    %1536 = vmatmul.f32.gmra.mxu0 %v1535
    %v1537 = vpop.f32.mrf.mxu0
    %v1538 = vadd.f32 %v1499, %v1537
    %1539 = vdwg.mxu0
    %v1540 = vand.u32 %v281, 4294901760
    %v1541 = vsub.f32 %v281, %v1540
    %v1542 = vand.u32 %v1541, 4294901760
    %1543 = vmatpush.msra.mxu0 %v1542
    %v1544 = vand.u32 %v279, 4294901760
    %v1545 = vsub.f32 %v279, %v1544
    %v1546 = vand.u32 %v1545, 4294901760
    %1547 = vmatpush.msra.mxu0 %v1546
    %v1548 = vand.u32 %v277, 4294901760
    %v1549 = vsub.f32 %v277, %v1548
    %v1550 = vand.u32 %v1549, 4294901760
    %1551 = vmatpush.msra.mxu0 %v1550
    %v1552 = vand.u32 %v275, 4294901760
    %v1553 = vsub.f32 %v275, %v1552
    %v1554 = vand.u32 %v1553, 4294901760
    %1555 = vmatpush.msra.mxu0 %v1554
    %v1556 = vand.u32 %v273, 4294901760
    %v1557 = vsub.f32 %v273, %v1556
    %v1558 = vand.u32 %v1557, 4294901760
    %1559 = vmatpush.msra.mxu0 %v1558
    %v1560 = vand.u32 %v271, 4294901760
    %v1561 = vsub.f32 %v271, %v1560
    %v1562 = vand.u32 %v1561, 4294901760
    %1563 = vmatpush.msra.mxu0 %v1562
    %v1564 = vand.u32 %v269, 4294901760
    %v1565 = vsub.f32 %v269, %v1564
    %v1566 = vand.u32 %v1565, 4294901760
    %1567 = vmatpush.msra.mxu0 %v1566
    %v1568 = vand.u32 %v267, 4294901760
    %v1569 = vsub.f32 %v267, %v1568
    %v1570 = vand.u32 %v1569, 4294901760
    %1571 = vmatpush.msra.mxu0 %v1570
    %v1572 = vand.u32 %v265, 4294901760
    %v1573 = vsub.f32 %v265, %v1572
    %v1574 = vand.u32 %v1573, 4294901760
    %1575 = vmatpush.msra.mxu0 %v1574
    %v1576 = vand.u32 %v263, 4294901760
    %v1577 = vsub.f32 %v263, %v1576
    %v1578 = vand.u32 %v1577, 4294901760
    %1579 = vmatpush.msra.mxu0 %v1578
    %v1580 = vand.u32 %v261, 4294901760
    %v1581 = vsub.f32 %v261, %v1580
    %v1582 = vand.u32 %v1581, 4294901760
    %1583 = vmatpush.msra.mxu0 %v1582
    %v1584 = vand.u32 %v259, 4294901760
    %v1585 = vsub.f32 %v259, %v1584
    %v1586 = vand.u32 %v1585, 4294901760
    %1587 = vmatpush.msra.mxu0 %v1586
    %v1588 = vand.u32 %v257, 4294901760
    %v1589 = vsub.f32 %v257, %v1588
    %v1590 = vand.u32 %v1589, 4294901760
    %1591 = vmatpush.msra.mxu0 %v1590
    %v1592 = vand.u32 %v255, 4294901760
    %v1593 = vsub.f32 %v255, %v1592
    %v1594 = vand.u32 %v1593, 4294901760
    %1595 = vmatpush.msra.mxu0 %v1594
    %v1596 = vand.u32 %v253, 4294901760
    %v1597 = vsub.f32 %v253, %v1596
    %v1598 = vand.u32 %v1597, 4294901760
    %1599 = vmatpush.msra.mxu0 %v1598
    %v1600 = vand.u32 %v251, 4294901760
    %v1601 = vsub.f32 %v251, %v1600
    %v1602 = vand.u32 %v1601, 4294901760
    %1603 = vmatpush.msra.mxu0 %v1602
    %v1604 = vand.u32 %v152, 4294901760
    %1605 = vmatmul.f32.gmra.mxu0 %v1604
    %v1606 = vpop.f32.mrf.mxu0
    %v1607 = vadd.f32 %v1538, %v1606
    %1608 = vdwg.mxu0
    %v1609 = vand.u32 %v281, 4294901760
    %1610 = vmatpush.msra.mxu0 %v1609
    %v1611 = vand.u32 %v279, 4294901760
    %1612 = vmatpush.msra.mxu0 %v1611
    %v1613 = vand.u32 %v277, 4294901760
    %1614 = vmatpush.msra.mxu0 %v1613
    %v1615 = vand.u32 %v275, 4294901760
    %1616 = vmatpush.msra.mxu0 %v1615
    %v1617 = vand.u32 %v273, 4294901760
    %1618 = vmatpush.msra.mxu0 %v1617
    %v1619 = vand.u32 %v271, 4294901760
    %1620 = vmatpush.msra.mxu0 %v1619
    %v1621 = vand.u32 %v269, 4294901760
    %1622 = vmatpush.msra.mxu0 %v1621
    %v1623 = vand.u32 %v267, 4294901760
    %1624 = vmatpush.msra.mxu0 %v1623
    %v1625 = vand.u32 %v265, 4294901760
    %1626 = vmatpush.msra.mxu0 %v1625
    %v1627 = vand.u32 %v263, 4294901760
    %1628 = vmatpush.msra.mxu0 %v1627
    %v1629 = vand.u32 %v261, 4294901760
    %1630 = vmatpush.msra.mxu0 %v1629
    %v1631 = vand.u32 %v259, 4294901760
    %1632 = vmatpush.msra.mxu0 %v1631
    %v1633 = vand.u32 %v257, 4294901760
    %1634 = vmatpush.msra.mxu0 %v1633
    %v1635 = vand.u32 %v255, 4294901760
    %1636 = vmatpush.msra.mxu0 %v1635
    %v1637 = vand.u32 %v253, 4294901760
    %1638 = vmatpush.msra.mxu0 %v1637
    %v1639 = vand.u32 %v251, 4294901760
    %1640 = vmatpush.msra.mxu0 %v1639
    %v1641 = vand.u32 %v152, 4294901760
    %1642 = vmatmul.f32.gmra.mxu0 %v1641
    %v1643 = vpop.f32.mrf.mxu0
    %v1644 = vadd.f32 %v1607, %v1643
    %1645 = vdwg.mxu0
    %v1646 = vand.u32 %v183, 4294901760
    %1647 = vmatpush.msra.mxu0 %v1646
    %v1648 = vand.u32 %v181, 4294901760
    %1649 = vmatpush.msra.mxu0 %v1648
    %v1650 = vand.u32 %v179, 4294901760
    %1651 = vmatpush.msra.mxu0 %v1650
    %v1652 = vand.u32 %v177, 4294901760
    %1653 = vmatpush.msra.mxu0 %v1652
    %v1654 = vand.u32 %v175, 4294901760
    %1655 = vmatpush.msra.mxu0 %v1654
    %v1656 = vand.u32 %v173, 4294901760
    %1657 = vmatpush.msra.mxu0 %v1656
    %v1658 = vand.u32 %v171, 4294901760
    %1659 = vmatpush.msra.mxu0 %v1658
    %v1660 = vand.u32 %v169, 4294901760
    %1661 = vmatpush.msra.mxu0 %v1660
    %v1662 = vand.u32 %v167, 4294901760
    %1663 = vmatpush.msra.mxu0 %v1662
    %v1664 = vand.u32 %v165, 4294901760
    %1665 = vmatpush.msra.mxu0 %v1664
    %v1666 = vand.u32 %v163, 4294901760
    %1667 = vmatpush.msra.mxu0 %v1666
    %v1668 = vand.u32 %v161, 4294901760
    %1669 = vmatpush.msra.mxu0 %v1668
    %v1670 = vand.u32 %v159, 4294901760
    %1671 = vmatpush.msra.mxu0 %v1670
    %v1672 = vand.u32 %v157, 4294901760
    %1673 = vmatpush.msra.mxu0 %v1672
    %v1674 = vand.u32 %v155, 4294901760
    %1675 = vmatpush.msra.mxu0 %v1674
    %v1676 = vand.u32 %v153, 4294901760
    %1677 = vmatpush.msra.mxu0 %v1676
    %v1678 = vand.u32 %v141, 4294901760
    %v1679 = vsub.f32 %v141, %v1678
    %v1680 = vand.u32 %v1679, 4294901760
    %v1681 = vsub.f32 %v1679, %v1680
    %v1682 = vand.u32 %v1681, 4294901760
    %1683 = vmatmul.f32.gmra.mxu0 %v1682
    %v1684 = vpop.f32.mrf.mxu0
    %v1685 = vadd.f32 %v962, %v1684
    %1686 = vdwg.mxu0
    %v1687 = vand.u32 %v183, 4294901760
    %v1688 = vsub.f32 %v183, %v1687
    %v1689 = vand.u32 %v1688, 4294901760
    %v1690 = vsub.f32 %v1688, %v1689
    %v1691 = vand.u32 %v1690, 4294901760
    %1692 = vmatpush.msra.mxu0 %v1691
    %v1693 = vand.u32 %v181, 4294901760
    %v1694 = vsub.f32 %v181, %v1693
    %v1695 = vand.u32 %v1694, 4294901760
    %v1696 = vsub.f32 %v1694, %v1695
    %v1697 = vand.u32 %v1696, 4294901760
    %1698 = vmatpush.msra.mxu0 %v1697
    %v1699 = vand.u32 %v179, 4294901760
    %v1700 = vsub.f32 %v179, %v1699
    %v1701 = vand.u32 %v1700, 4294901760
    %v1702 = vsub.f32 %v1700, %v1701
    %v1703 = vand.u32 %v1702, 4294901760
    %1704 = vmatpush.msra.mxu0 %v1703
    %v1705 = vand.u32 %v177, 4294901760
    %v1706 = vsub.f32 %v177, %v1705
    %v1707 = vand.u32 %v1706, 4294901760
    %v1708 = vsub.f32 %v1706, %v1707
    %v1709 = vand.u32 %v1708, 4294901760
    %1710 = vmatpush.msra.mxu0 %v1709
    %v1711 = vand.u32 %v175, 4294901760
    %v1712 = vsub.f32 %v175, %v1711
    %v1713 = vand.u32 %v1712, 4294901760
    %v1714 = vsub.f32 %v1712, %v1713
    %v1715 = vand.u32 %v1714, 4294901760
    %1716 = vmatpush.msra.mxu0 %v1715
    %v1717 = vand.u32 %v173, 4294901760
    %v1718 = vsub.f32 %v173, %v1717
    %v1719 = vand.u32 %v1718, 4294901760
    %v1720 = vsub.f32 %v1718, %v1719
    %v1721 = vand.u32 %v1720, 4294901760
    %1722 = vmatpush.msra.mxu0 %v1721
    %v1723 = vand.u32 %v171, 4294901760
    %v1724 = vsub.f32 %v171, %v1723
    %v1725 = vand.u32 %v1724, 4294901760
    %v1726 = vsub.f32 %v1724, %v1725
    %v1727 = vand.u32 %v1726, 4294901760
    %1728 = vmatpush.msra.mxu0 %v1727
    %v1729 = vand.u32 %v169, 4294901760
    %v1730 = vsub.f32 %v169, %v1729
    %v1731 = vand.u32 %v1730, 4294901760
    %v1732 = vsub.f32 %v1730, %v1731
    %v1733 = vand.u32 %v1732, 4294901760
    %1734 = vmatpush.msra.mxu0 %v1733
    %v1735 = vand.u32 %v167, 4294901760
    %v1736 = vsub.f32 %v167, %v1735
    %v1737 = vand.u32 %v1736, 4294901760
    %v1738 = vsub.f32 %v1736, %v1737
    %v1739 = vand.u32 %v1738, 4294901760
    %1740 = vmatpush.msra.mxu0 %v1739
    %v1741 = vand.u32 %v165, 4294901760
    %v1742 = vsub.f32 %v165, %v1741
    %v1743 = vand.u32 %v1742, 4294901760
    %v1744 = vsub.f32 %v1742, %v1743
    %v1745 = vand.u32 %v1744, 4294901760
    %1746 = vmatpush.msra.mxu0 %v1745
    %v1747 = vand.u32 %v163, 4294901760
    %v1748 = vsub.f32 %v163, %v1747
    %v1749 = vand.u32 %v1748, 4294901760
    %v1750 = vsub.f32 %v1748, %v1749
    %v1751 = vand.u32 %v1750, 4294901760
    %1752 = vmatpush.msra.mxu0 %v1751
    %v1753 = vand.u32 %v161, 4294901760
    %v1754 = vsub.f32 %v161, %v1753
    %v1755 = vand.u32 %v1754, 4294901760
    %v1756 = vsub.f32 %v1754, %v1755
    %v1757 = vand.u32 %v1756, 4294901760
    %1758 = vmatpush.msra.mxu0 %v1757
    %v1759 = vand.u32 %v159, 4294901760
    %v1760 = vsub.f32 %v159, %v1759
    %v1761 = vand.u32 %v1760, 4294901760
    %v1762 = vsub.f32 %v1760, %v1761
    %v1763 = vand.u32 %v1762, 4294901760
    %1764 = vmatpush.msra.mxu0 %v1763
    %v1765 = vand.u32 %v157, 4294901760
    %v1766 = vsub.f32 %v157, %v1765
    %v1767 = vand.u32 %v1766, 4294901760
    %v1768 = vsub.f32 %v1766, %v1767
    %v1769 = vand.u32 %v1768, 4294901760
    %1770 = vmatpush.msra.mxu0 %v1769
    %v1771 = vand.u32 %v155, 4294901760
    %v1772 = vsub.f32 %v155, %v1771
    %v1773 = vand.u32 %v1772, 4294901760
    %v1774 = vsub.f32 %v1772, %v1773
    %v1775 = vand.u32 %v1774, 4294901760
    %1776 = vmatpush.msra.mxu0 %v1775
    %v1777 = vand.u32 %v153, 4294901760
    %v1778 = vsub.f32 %v153, %v1777
    %v1779 = vand.u32 %v1778, 4294901760
    %v1780 = vsub.f32 %v1778, %v1779
    %v1781 = vand.u32 %v1780, 4294901760
    %1782 = vmatpush.msra.mxu0 %v1781
    %v1783 = vand.u32 %v141, 4294901760
    %1784 = vmatmul.f32.gmra.mxu0 %v1783
    %v1785 = vpop.f32.mrf.mxu0
    %v1786 = vadd.f32 %v1685, %v1785
    %1787 = vdwg.mxu0
    %v1788 = vand.u32 %v183, 4294901760
    %v1789 = vsub.f32 %v183, %v1788
    %1790 = vmatpush.msra.mxu0 %v1789
    %v1791 = vand.u32 %v181, 4294901760
    %v1792 = vsub.f32 %v181, %v1791
    %1793 = vmatpush.msra.mxu0 %v1792
    %v1794 = vand.u32 %v179, 4294901760
    %v1795 = vsub.f32 %v179, %v1794
    %1796 = vmatpush.msra.mxu0 %v1795
    %v1797 = vand.u32 %v177, 4294901760
    %v1798 = vsub.f32 %v177, %v1797
    %1799 = vmatpush.msra.mxu0 %v1798
    %v1800 = vand.u32 %v175, 4294901760
    %v1801 = vsub.f32 %v175, %v1800
    %1802 = vmatpush.msra.mxu0 %v1801
    %v1803 = vand.u32 %v173, 4294901760
    %v1804 = vsub.f32 %v173, %v1803
    %1805 = vmatpush.msra.mxu0 %v1804
    %v1806 = vand.u32 %v171, 4294901760
    %v1807 = vsub.f32 %v171, %v1806
    %1808 = vmatpush.msra.mxu0 %v1807
    %v1809 = vand.u32 %v169, 4294901760
    %v1810 = vsub.f32 %v169, %v1809
    %1811 = vmatpush.msra.mxu0 %v1810
    %v1812 = vand.u32 %v167, 4294901760
    %v1813 = vsub.f32 %v167, %v1812
    %1814 = vmatpush.msra.mxu0 %v1813
    %v1815 = vand.u32 %v165, 4294901760
    %v1816 = vsub.f32 %v165, %v1815
    %1817 = vmatpush.msra.mxu0 %v1816
    %v1818 = vand.u32 %v163, 4294901760
    %v1819 = vsub.f32 %v163, %v1818
    %1820 = vmatpush.msra.mxu0 %v1819
    %v1821 = vand.u32 %v161, 4294901760
    %v1822 = vsub.f32 %v161, %v1821
    %1823 = vmatpush.msra.mxu0 %v1822
    %v1824 = vand.u32 %v159, 4294901760
    %v1825 = vsub.f32 %v159, %v1824
    %1826 = vmatpush.msra.mxu0 %v1825
    %v1827 = vand.u32 %v157, 4294901760
    %v1828 = vsub.f32 %v157, %v1827
    %1829 = vmatpush.msra.mxu0 %v1828
    %v1830 = vand.u32 %v155, 4294901760
    %v1831 = vsub.f32 %v155, %v1830
    %1832 = vmatpush.msra.mxu0 %v1831
    %v1833 = vand.u32 %v153, 4294901760
    %v1834 = vsub.f32 %v153, %v1833
    %1835 = vmatpush.msra.mxu0 %v1834
    %v1836 = vand.u32 %v141, 4294901760
    %v1837 = vsub.f32 %v141, %v1836
    %1838 = vmatmul.f32.gmra.mxu0 %v1837
    %v1839 = vpop.f32.mrf.mxu0
    %v1840 = vadd.f32 %v1786, %v1839
    %1841 = vdwg.mxu0
    %v1842 = vand.u32 %v183, 4294901760
    %1843 = vmatpush.msra.mxu0 %v1842
    %v1844 = vand.u32 %v181, 4294901760
    %1845 = vmatpush.msra.mxu0 %v1844
    %v1846 = vand.u32 %v179, 4294901760
    %1847 = vmatpush.msra.mxu0 %v1846
    %v1848 = vand.u32 %v177, 4294901760
    %1849 = vmatpush.msra.mxu0 %v1848
    %v1850 = vand.u32 %v175, 4294901760
    %1851 = vmatpush.msra.mxu0 %v1850
    %v1852 = vand.u32 %v173, 4294901760
    %1853 = vmatpush.msra.mxu0 %v1852
    %v1854 = vand.u32 %v171, 4294901760
    %1855 = vmatpush.msra.mxu0 %v1854
    %v1856 = vand.u32 %v169, 4294901760
    %1857 = vmatpush.msra.mxu0 %v1856
    %v1858 = vand.u32 %v167, 4294901760
    %1859 = vmatpush.msra.mxu0 %v1858
    %v1860 = vand.u32 %v165, 4294901760
    %1861 = vmatpush.msra.mxu0 %v1860
    %v1862 = vand.u32 %v163, 4294901760
    %1863 = vmatpush.msra.mxu0 %v1862
    %v1864 = vand.u32 %v161, 4294901760
    %1865 = vmatpush.msra.mxu0 %v1864
    %v1866 = vand.u32 %v159, 4294901760
    %1867 = vmatpush.msra.mxu0 %v1866
    %v1868 = vand.u32 %v157, 4294901760
    %1869 = vmatpush.msra.mxu0 %v1868
    %v1870 = vand.u32 %v155, 4294901760
    %1871 = vmatpush.msra.mxu0 %v1870
    %v1872 = vand.u32 %v153, 4294901760
    %1873 = vmatpush.msra.mxu0 %v1872
    %v1874 = vand.u32 %v141, 4294901760
    %v1875 = vsub.f32 %v141, %v1874
    %v1876 = vand.u32 %v1875, 4294901760
    %1877 = vmatmul.f32.gmra.mxu0 %v1876
    %v1878 = vpop.f32.mrf.mxu0
    %v1879 = vadd.f32 %v1840, %v1878
    %1880 = vdwg.mxu0
    %v1881 = vand.u32 %v183, 4294901760
    %v1882 = vsub.f32 %v183, %v1881
    %v1883 = vand.u32 %v1882, 4294901760
    %1884 = vmatpush.msra.mxu0 %v1883
    %v1885 = vand.u32 %v181, 4294901760
    %v1886 = vsub.f32 %v181, %v1885
    %v1887 = vand.u32 %v1886, 4294901760
    %1888 = vmatpush.msra.mxu0 %v1887
    %v1889 = vand.u32 %v179, 4294901760
    %v1890 = vsub.f32 %v179, %v1889
    %v1891 = vand.u32 %v1890, 4294901760
    %1892 = vmatpush.msra.mxu0 %v1891
    %v1893 = vand.u32 %v177, 4294901760
    %v1894 = vsub.f32 %v177, %v1893
    %v1895 = vand.u32 %v1894, 4294901760
    %1896 = vmatpush.msra.mxu0 %v1895
    %v1897 = vand.u32 %v175, 4294901760
    %v1898 = vsub.f32 %v175, %v1897
    %v1899 = vand.u32 %v1898, 4294901760
    %1900 = vmatpush.msra.mxu0 %v1899
    %v1901 = vand.u32 %v173, 4294901760
    %v1902 = vsub.f32 %v173, %v1901
    %v1903 = vand.u32 %v1902, 4294901760
    %1904 = vmatpush.msra.mxu0 %v1903
    %v1905 = vand.u32 %v171, 4294901760
    %v1906 = vsub.f32 %v171, %v1905
    %v1907 = vand.u32 %v1906, 4294901760
    %1908 = vmatpush.msra.mxu0 %v1907
    %v1909 = vand.u32 %v169, 4294901760
    %v1910 = vsub.f32 %v169, %v1909
    %v1911 = vand.u32 %v1910, 4294901760
    %1912 = vmatpush.msra.mxu0 %v1911
    %v1913 = vand.u32 %v167, 4294901760
    %v1914 = vsub.f32 %v167, %v1913
    %v1915 = vand.u32 %v1914, 4294901760
    %1916 = vmatpush.msra.mxu0 %v1915
    %v1917 = vand.u32 %v165, 4294901760
    %v1918 = vsub.f32 %v165, %v1917
    %v1919 = vand.u32 %v1918, 4294901760
    %1920 = vmatpush.msra.mxu0 %v1919
    %v1921 = vand.u32 %v163, 4294901760
    %v1922 = vsub.f32 %v163, %v1921
    %v1923 = vand.u32 %v1922, 4294901760
    %1924 = vmatpush.msra.mxu0 %v1923
    %v1925 = vand.u32 %v161, 4294901760
    %v1926 = vsub.f32 %v161, %v1925
    %v1927 = vand.u32 %v1926, 4294901760
    %1928 = vmatpush.msra.mxu0 %v1927
    %v1929 = vand.u32 %v159, 4294901760
    %v1930 = vsub.f32 %v159, %v1929
    %v1931 = vand.u32 %v1930, 4294901760
    %1932 = vmatpush.msra.mxu0 %v1931
    %v1933 = vand.u32 %v157, 4294901760
    %v1934 = vsub.f32 %v157, %v1933
    %v1935 = vand.u32 %v1934, 4294901760
    %1936 = vmatpush.msra.mxu0 %v1935
    %v1937 = vand.u32 %v155, 4294901760
    %v1938 = vsub.f32 %v155, %v1937
    %v1939 = vand.u32 %v1938, 4294901760
    %1940 = vmatpush.msra.mxu0 %v1939
    %v1941 = vand.u32 %v153, 4294901760
    %v1942 = vsub.f32 %v153, %v1941
    %v1943 = vand.u32 %v1942, 4294901760
    %1944 = vmatpush.msra.mxu0 %v1943
    %v1945 = vand.u32 %v141, 4294901760
    %1946 = vmatmul.f32.gmra.mxu0 %v1945
    %v1947 = vpop.f32.mrf.mxu0
    %v1948 = vadd.f32 %v1879, %v1947
    %1949 = vdwg.mxu0
    %v1950 = vand.u32 %v183, 4294901760
    %1951 = vmatpush.msra.mxu0 %v1950
    %v1952 = vand.u32 %v181, 4294901760
    %1953 = vmatpush.msra.mxu0 %v1952
    %v1954 = vand.u32 %v179, 4294901760
    %1955 = vmatpush.msra.mxu0 %v1954
    %v1956 = vand.u32 %v177, 4294901760
    %1957 = vmatpush.msra.mxu0 %v1956
    %v1958 = vand.u32 %v175, 4294901760
    %1959 = vmatpush.msra.mxu0 %v1958
    %v1960 = vand.u32 %v173, 4294901760
    %1961 = vmatpush.msra.mxu0 %v1960
    %v1962 = vand.u32 %v171, 4294901760
    %1963 = vmatpush.msra.mxu0 %v1962
    %v1964 = vand.u32 %v169, 4294901760
    %1965 = vmatpush.msra.mxu0 %v1964
    %v1966 = vand.u32 %v167, 4294901760
    %1967 = vmatpush.msra.mxu0 %v1966
    %v1968 = vand.u32 %v165, 4294901760
    %1969 = vmatpush.msra.mxu0 %v1968
    %v1970 = vand.u32 %v163, 4294901760
    %1971 = vmatpush.msra.mxu0 %v1970
    %v1972 = vand.u32 %v161, 4294901760
    %1973 = vmatpush.msra.mxu0 %v1972
    %v1974 = vand.u32 %v159, 4294901760
    %1975 = vmatpush.msra.mxu0 %v1974
    %v1976 = vand.u32 %v157, 4294901760
    %1977 = vmatpush.msra.mxu0 %v1976
    %v1978 = vand.u32 %v155, 4294901760
    %1979 = vmatpush.msra.mxu0 %v1978
    %v1980 = vand.u32 %v153, 4294901760
    %1981 = vmatpush.msra.mxu0 %v1980
    %v1982 = vand.u32 %v141, 4294901760
    %1983 = vmatmul.f32.gmra.mxu0 %v1982
    %v1984 = vpop.f32.mrf.mxu0
    %v1985 = vadd.f32 %v1948, %v1984
    %1986 = vdwg.mxu0
    %v1987 = vand.u32 %v215, 4294901760
    %1988 = vmatpush.msra.mxu0 %v1987
    %v1989 = vand.u32 %v213, 4294901760
    %1990 = vmatpush.msra.mxu0 %v1989
    %v1991 = vand.u32 %v211, 4294901760
    %1992 = vmatpush.msra.mxu0 %v1991
    %v1993 = vand.u32 %v209, 4294901760
    %1994 = vmatpush.msra.mxu0 %v1993
    %v1995 = vand.u32 %v207, 4294901760
    %1996 = vmatpush.msra.mxu0 %v1995
    %v1997 = vand.u32 %v205, 4294901760
    %1998 = vmatpush.msra.mxu0 %v1997
    %v1999 = vand.u32 %v203, 4294901760
    %2000 = vmatpush.msra.mxu0 %v1999
    %v2001 = vand.u32 %v201, 4294901760
    %2002 = vmatpush.msra.mxu0 %v2001
    %v2003 = vand.u32 %v199, 4294901760
    %2004 = vmatpush.msra.mxu0 %v2003
    %v2005 = vand.u32 %v197, 4294901760
    %2006 = vmatpush.msra.mxu0 %v2005
    %v2007 = vand.u32 %v195, 4294901760
    %2008 = vmatpush.msra.mxu0 %v2007
    %v2009 = vand.u32 %v193, 4294901760
    %2010 = vmatpush.msra.mxu0 %v2009
    %v2011 = vand.u32 %v191, 4294901760
    %2012 = vmatpush.msra.mxu0 %v2011
    %v2013 = vand.u32 %v189, 4294901760
    %2014 = vmatpush.msra.mxu0 %v2013
    %v2015 = vand.u32 %v187, 4294901760
    %2016 = vmatpush.msra.mxu0 %v2015
    %v2017 = vand.u32 %v185, 4294901760
    %2018 = vmatpush.msra.mxu0 %v2017
    %v2019 = vand.u32 %v142, 4294901760
    %v2020 = vsub.f32 %v142, %v2019
    %v2021 = vand.u32 %v2020, 4294901760
    %v2022 = vsub.f32 %v2020, %v2021
    %v2023 = vand.u32 %v2022, 4294901760
    %2024 = vmatmul.f32.gmra.mxu0 %v2023
    %v2025 = vpop.f32.mrf.mxu0
    %v2026 = vadd.f32 %v1985, %v2025
    %2027 = vdwg.mxu0
    %v2028 = vand.u32 %v215, 4294901760
    %v2029 = vsub.f32 %v215, %v2028
    %v2030 = vand.u32 %v2029, 4294901760
    %v2031 = vsub.f32 %v2029, %v2030
    %v2032 = vand.u32 %v2031, 4294901760
    %2033 = vmatpush.msra.mxu0 %v2032
    %v2034 = vand.u32 %v213, 4294901760
    %v2035 = vsub.f32 %v213, %v2034
    %v2036 = vand.u32 %v2035, 4294901760
    %v2037 = vsub.f32 %v2035, %v2036
    %v2038 = vand.u32 %v2037, 4294901760
    %2039 = vmatpush.msra.mxu0 %v2038
    %v2040 = vand.u32 %v211, 4294901760
    %v2041 = vsub.f32 %v211, %v2040
    %v2042 = vand.u32 %v2041, 4294901760
    %v2043 = vsub.f32 %v2041, %v2042
    %v2044 = vand.u32 %v2043, 4294901760
    %2045 = vmatpush.msra.mxu0 %v2044
    %v2046 = vand.u32 %v209, 4294901760
    %v2047 = vsub.f32 %v209, %v2046
    %v2048 = vand.u32 %v2047, 4294901760
    %v2049 = vsub.f32 %v2047, %v2048
    %v2050 = vand.u32 %v2049, 4294901760
    %2051 = vmatpush.msra.mxu0 %v2050
    %v2052 = vand.u32 %v207, 4294901760
    %v2053 = vsub.f32 %v207, %v2052
    %v2054 = vand.u32 %v2053, 4294901760
    %v2055 = vsub.f32 %v2053, %v2054
    %v2056 = vand.u32 %v2055, 4294901760
    %2057 = vmatpush.msra.mxu0 %v2056
    %v2058 = vand.u32 %v205, 4294901760
    %v2059 = vsub.f32 %v205, %v2058
    %v2060 = vand.u32 %v2059, 4294901760
    %v2061 = vsub.f32 %v2059, %v2060
    %v2062 = vand.u32 %v2061, 4294901760
    %2063 = vmatpush.msra.mxu0 %v2062
    %v2064 = vand.u32 %v203, 4294901760
    %v2065 = vsub.f32 %v203, %v2064
    %v2066 = vand.u32 %v2065, 4294901760
    %v2067 = vsub.f32 %v2065, %v2066
    %v2068 = vand.u32 %v2067, 4294901760
    %2069 = vmatpush.msra.mxu0 %v2068
    %v2070 = vand.u32 %v201, 4294901760
    %v2071 = vsub.f32 %v201, %v2070
    %v2072 = vand.u32 %v2071, 4294901760
    %v2073 = vsub.f32 %v2071, %v2072
    %v2074 = vand.u32 %v2073, 4294901760
    %2075 = vmatpush.msra.mxu0 %v2074
    %v2076 = vand.u32 %v199, 4294901760
    %v2077 = vsub.f32 %v199, %v2076
    %v2078 = vand.u32 %v2077, 4294901760
    %v2079 = vsub.f32 %v2077, %v2078
    %v2080 = vand.u32 %v2079, 4294901760
    %2081 = vmatpush.msra.mxu0 %v2080
    %v2082 = vand.u32 %v197, 4294901760
    %v2083 = vsub.f32 %v197, %v2082
    %v2084 = vand.u32 %v2083, 4294901760
    %v2085 = vsub.f32 %v2083, %v2084
    %v2086 = vand.u32 %v2085, 4294901760
    %2087 = vmatpush.msra.mxu0 %v2086
    %v2088 = vand.u32 %v195, 4294901760
    %v2089 = vsub.f32 %v195, %v2088
    %v2090 = vand.u32 %v2089, 4294901760
    %v2091 = vsub.f32 %v2089, %v2090
    %v2092 = vand.u32 %v2091, 4294901760
    %2093 = vmatpush.msra.mxu0 %v2092
    %v2094 = vand.u32 %v193, 4294901760
    %v2095 = vsub.f32 %v193, %v2094
    %v2096 = vand.u32 %v2095, 4294901760
    %v2097 = vsub.f32 %v2095, %v2096
    %v2098 = vand.u32 %v2097, 4294901760
    %2099 = vmatpush.msra.mxu0 %v2098
    %v2100 = vand.u32 %v191, 4294901760
    %v2101 = vsub.f32 %v191, %v2100
    %v2102 = vand.u32 %v2101, 4294901760
    %v2103 = vsub.f32 %v2101, %v2102
    %v2104 = vand.u32 %v2103, 4294901760
    %2105 = vmatpush.msra.mxu0 %v2104
    %v2106 = vand.u32 %v189, 4294901760
    %v2107 = vsub.f32 %v189, %v2106
    %v2108 = vand.u32 %v2107, 4294901760
    %v2109 = vsub.f32 %v2107, %v2108
    %v2110 = vand.u32 %v2109, 4294901760
    %2111 = vmatpush.msra.mxu0 %v2110
    %v2112 = vand.u32 %v187, 4294901760
    %v2113 = vsub.f32 %v187, %v2112
    %v2114 = vand.u32 %v2113, 4294901760
    %v2115 = vsub.f32 %v2113, %v2114
    %v2116 = vand.u32 %v2115, 4294901760
    %2117 = vmatpush.msra.mxu0 %v2116
    %v2118 = vand.u32 %v185, 4294901760
    %v2119 = vsub.f32 %v185, %v2118
    %v2120 = vand.u32 %v2119, 4294901760
    %v2121 = vsub.f32 %v2119, %v2120
    %v2122 = vand.u32 %v2121, 4294901760
    %2123 = vmatpush.msra.mxu0 %v2122
    %v2124 = vand.u32 %v142, 4294901760
    %2125 = vmatmul.f32.gmra.mxu0 %v2124
    %v2126 = vpop.f32.mrf.mxu0
    %v2127 = vadd.f32 %v2026, %v2126
    %2128 = vdwg.mxu0
    %v2129 = vand.u32 %v215, 4294901760
    %v2130 = vsub.f32 %v215, %v2129
    %2131 = vmatpush.msra.mxu0 %v2130
    %v2132 = vand.u32 %v213, 4294901760
    %v2133 = vsub.f32 %v213, %v2132
    %2134 = vmatpush.msra.mxu0 %v2133
    %v2135 = vand.u32 %v211, 4294901760
    %v2136 = vsub.f32 %v211, %v2135
    %2137 = vmatpush.msra.mxu0 %v2136
    %v2138 = vand.u32 %v209, 4294901760
    %v2139 = vsub.f32 %v209, %v2138
    %2140 = vmatpush.msra.mxu0 %v2139
    %v2141 = vand.u32 %v207, 4294901760
    %v2142 = vsub.f32 %v207, %v2141
    %2143 = vmatpush.msra.mxu0 %v2142
    %v2144 = vand.u32 %v205, 4294901760
    %v2145 = vsub.f32 %v205, %v2144
    %2146 = vmatpush.msra.mxu0 %v2145
    %v2147 = vand.u32 %v203, 4294901760
    %v2148 = vsub.f32 %v203, %v2147
    %2149 = vmatpush.msra.mxu0 %v2148
    %v2150 = vand.u32 %v201, 4294901760
    %v2151 = vsub.f32 %v201, %v2150
    %2152 = vmatpush.msra.mxu0 %v2151
    %v2153 = vand.u32 %v199, 4294901760
    %v2154 = vsub.f32 %v199, %v2153
    %2155 = vmatpush.msra.mxu0 %v2154
    %v2156 = vand.u32 %v197, 4294901760
    %v2157 = vsub.f32 %v197, %v2156
    %2158 = vmatpush.msra.mxu0 %v2157
    %v2159 = vand.u32 %v195, 4294901760
    %v2160 = vsub.f32 %v195, %v2159
    %2161 = vmatpush.msra.mxu0 %v2160
    %v2162 = vand.u32 %v193, 4294901760
    %v2163 = vsub.f32 %v193, %v2162
    %2164 = vmatpush.msra.mxu0 %v2163
    %v2165 = vand.u32 %v191, 4294901760
    %v2166 = vsub.f32 %v191, %v2165
    %2167 = vmatpush.msra.mxu0 %v2166
    %v2168 = vand.u32 %v189, 4294901760
    %v2169 = vsub.f32 %v189, %v2168
    %2170 = vmatpush.msra.mxu0 %v2169
    %v2171 = vand.u32 %v187, 4294901760
    %v2172 = vsub.f32 %v187, %v2171
    %2173 = vmatpush.msra.mxu0 %v2172
    %v2174 = vand.u32 %v185, 4294901760
    %v2175 = vsub.f32 %v185, %v2174
    %2176 = vmatpush.msra.mxu0 %v2175
    %v2177 = vand.u32 %v142, 4294901760
    %v2178 = vsub.f32 %v142, %v2177
    %2179 = vmatmul.f32.gmra.mxu0 %v2178
    %v2180 = vpop.f32.mrf.mxu0
    %v2181 = vadd.f32 %v2127, %v2180
    %2182 = vdwg.mxu0
    %v2183 = vand.u32 %v215, 4294901760
    %2184 = vmatpush.msra.mxu0 %v2183
    %v2185 = vand.u32 %v213, 4294901760
    %2186 = vmatpush.msra.mxu0 %v2185
    %v2187 = vand.u32 %v211, 4294901760
    %2188 = vmatpush.msra.mxu0 %v2187
    %v2189 = vand.u32 %v209, 4294901760
    %2190 = vmatpush.msra.mxu0 %v2189
    %v2191 = vand.u32 %v207, 4294901760
    %2192 = vmatpush.msra.mxu0 %v2191
    %v2193 = vand.u32 %v205, 4294901760
    %2194 = vmatpush.msra.mxu0 %v2193
    %v2195 = vand.u32 %v203, 4294901760
    %2196 = vmatpush.msra.mxu0 %v2195
    %v2197 = vand.u32 %v201, 4294901760
    %2198 = vmatpush.msra.mxu0 %v2197
    %v2199 = vand.u32 %v199, 4294901760
    %2200 = vmatpush.msra.mxu0 %v2199
    %v2201 = vand.u32 %v197, 4294901760
    %2202 = vmatpush.msra.mxu0 %v2201
    %v2203 = vand.u32 %v195, 4294901760
    %2204 = vmatpush.msra.mxu0 %v2203
    %v2205 = vand.u32 %v193, 4294901760
    %2206 = vmatpush.msra.mxu0 %v2205
    %v2207 = vand.u32 %v191, 4294901760
    %2208 = vmatpush.msra.mxu0 %v2207
    %v2209 = vand.u32 %v189, 4294901760
    %2210 = vmatpush.msra.mxu0 %v2209
    %v2211 = vand.u32 %v187, 4294901760
    %2212 = vmatpush.msra.mxu0 %v2211
    %v2213 = vand.u32 %v185, 4294901760
    %2214 = vmatpush.msra.mxu0 %v2213
    %v2215 = vand.u32 %v142, 4294901760
    %v2216 = vsub.f32 %v142, %v2215
    %v2217 = vand.u32 %v2216, 4294901760
    %2218 = vmatmul.f32.gmra.mxu0 %v2217
    %v2219 = vpop.f32.mrf.mxu0
    %v2220 = vadd.f32 %v2181, %v2219
    %2221 = vdwg.mxu0
    %v2222 = vand.u32 %v215, 4294901760
    %v2223 = vsub.f32 %v215, %v2222
    %v2224 = vand.u32 %v2223, 4294901760
    %2225 = vmatpush.msra.mxu0 %v2224
    %v2226 = vand.u32 %v213, 4294901760
    %v2227 = vsub.f32 %v213, %v2226
    %v2228 = vand.u32 %v2227, 4294901760
    %2229 = vmatpush.msra.mxu0 %v2228
    %v2230 = vand.u32 %v211, 4294901760
    %v2231 = vsub.f32 %v211, %v2230
    %v2232 = vand.u32 %v2231, 4294901760
    %2233 = vmatpush.msra.mxu0 %v2232
    %v2234 = vand.u32 %v209, 4294901760
    %v2235 = vsub.f32 %v209, %v2234
    %v2236 = vand.u32 %v2235, 4294901760
    %2237 = vmatpush.msra.mxu0 %v2236
    %v2238 = vand.u32 %v207, 4294901760
    %v2239 = vsub.f32 %v207, %v2238
    %v2240 = vand.u32 %v2239, 4294901760
    %2241 = vmatpush.msra.mxu0 %v2240
    %v2242 = vand.u32 %v205, 4294901760
    %v2243 = vsub.f32 %v205, %v2242
    %v2244 = vand.u32 %v2243, 4294901760
    %2245 = vmatpush.msra.mxu0 %v2244
    %v2246 = vand.u32 %v203, 4294901760
    %v2247 = vsub.f32 %v203, %v2246
    %v2248 = vand.u32 %v2247, 4294901760
    %2249 = vmatpush.msra.mxu0 %v2248
    %v2250 = vand.u32 %v201, 4294901760
    %v2251 = vsub.f32 %v201, %v2250
    %v2252 = vand.u32 %v2251, 4294901760
    %2253 = vmatpush.msra.mxu0 %v2252
    %v2254 = vand.u32 %v199, 4294901760
    %v2255 = vsub.f32 %v199, %v2254
    %v2256 = vand.u32 %v2255, 4294901760
    %2257 = vmatpush.msra.mxu0 %v2256
    %v2258 = vand.u32 %v197, 4294901760
    %v2259 = vsub.f32 %v197, %v2258
    %v2260 = vand.u32 %v2259, 4294901760
    %2261 = vmatpush.msra.mxu0 %v2260
    %v2262 = vand.u32 %v195, 4294901760
    %v2263 = vsub.f32 %v195, %v2262
    %v2264 = vand.u32 %v2263, 4294901760
    %2265 = vmatpush.msra.mxu0 %v2264
    %v2266 = vand.u32 %v193, 4294901760
    %v2267 = vsub.f32 %v193, %v2266
    %v2268 = vand.u32 %v2267, 4294901760
    %2269 = vmatpush.msra.mxu0 %v2268
    %v2270 = vand.u32 %v191, 4294901760
    %v2271 = vsub.f32 %v191, %v2270
    %v2272 = vand.u32 %v2271, 4294901760
    %2273 = vmatpush.msra.mxu0 %v2272
    %v2274 = vand.u32 %v189, 4294901760
    %v2275 = vsub.f32 %v189, %v2274
    %v2276 = vand.u32 %v2275, 4294901760
    %2277 = vmatpush.msra.mxu0 %v2276
    %v2278 = vand.u32 %v187, 4294901760
    %v2279 = vsub.f32 %v187, %v2278
    %v2280 = vand.u32 %v2279, 4294901760
    %2281 = vmatpush.msra.mxu0 %v2280
    %v2282 = vand.u32 %v185, 4294901760
    %v2283 = vsub.f32 %v185, %v2282
    %v2284 = vand.u32 %v2283, 4294901760
    %2285 = vmatpush.msra.mxu0 %v2284
    %v2286 = vand.u32 %v142, 4294901760
    %2287 = vmatmul.f32.gmra.mxu0 %v2286
    %v2288 = vpop.f32.mrf.mxu0
    %v2289 = vadd.f32 %v2220, %v2288
    %2290 = vdwg.mxu0
    %v2291 = vand.u32 %v215, 4294901760
    %2292 = vmatpush.msra.mxu0 %v2291
    %v2293 = vand.u32 %v213, 4294901760
    %2294 = vmatpush.msra.mxu0 %v2293
    %v2295 = vand.u32 %v211, 4294901760
    %2296 = vmatpush.msra.mxu0 %v2295
    %v2297 = vand.u32 %v209, 4294901760
    %2298 = vmatpush.msra.mxu0 %v2297
    %v2299 = vand.u32 %v207, 4294901760
    %2300 = vmatpush.msra.mxu0 %v2299
    %v2301 = vand.u32 %v205, 4294901760
    %2302 = vmatpush.msra.mxu0 %v2301
    %v2303 = vand.u32 %v203, 4294901760
    %2304 = vmatpush.msra.mxu0 %v2303
    %v2305 = vand.u32 %v201, 4294901760
    %2306 = vmatpush.msra.mxu0 %v2305
    %v2307 = vand.u32 %v199, 4294901760
    %2308 = vmatpush.msra.mxu0 %v2307
    %v2309 = vand.u32 %v197, 4294901760
    %2310 = vmatpush.msra.mxu0 %v2309
    %v2311 = vand.u32 %v195, 4294901760
    %2312 = vmatpush.msra.mxu0 %v2311
    %v2313 = vand.u32 %v193, 4294901760
    %2314 = vmatpush.msra.mxu0 %v2313
    %v2315 = vand.u32 %v191, 4294901760
    %2316 = vmatpush.msra.mxu0 %v2315
    %v2317 = vand.u32 %v189, 4294901760
    %2318 = vmatpush.msra.mxu0 %v2317
    %v2319 = vand.u32 %v187, 4294901760
    %2320 = vmatpush.msra.mxu0 %v2319
    %v2321 = vand.u32 %v185, 4294901760
    %2322 = vmatpush.msra.mxu0 %v2321
    %v2323 = vand.u32 %v142, 4294901760
    %2324 = vmatmul.f32.gmra.mxu0 %v2323
    %v2325 = vpop.f32.mrf.mxu0
    %v2326 = vadd.f32 %v2289, %v2325
    %2327 = vdwg.mxu0
    %v2328 = vand.u32 %v184, 4294901760
    %2329 = vmatpush.msra.mxu0 %v2328
    %v2330 = vand.u32 %v182, 4294901760
    %2331 = vmatpush.msra.mxu0 %v2330
    %v2332 = vand.u32 %v180, 4294901760
    %2333 = vmatpush.msra.mxu0 %v2332
    %v2334 = vand.u32 %v178, 4294901760
    %2335 = vmatpush.msra.mxu0 %v2334
    %v2336 = vand.u32 %v176, 4294901760
    %2337 = vmatpush.msra.mxu0 %v2336
    %v2338 = vand.u32 %v174, 4294901760
    %2339 = vmatpush.msra.mxu0 %v2338
    %v2340 = vand.u32 %v172, 4294901760
    %2341 = vmatpush.msra.mxu0 %v2340
    %v2342 = vand.u32 %v170, 4294901760
    %2343 = vmatpush.msra.mxu0 %v2342
    %v2344 = vand.u32 %v168, 4294901760
    %2345 = vmatpush.msra.mxu0 %v2344
    %v2346 = vand.u32 %v166, 4294901760
    %2347 = vmatpush.msra.mxu0 %v2346
    %v2348 = vand.u32 %v164, 4294901760
    %2349 = vmatpush.msra.mxu0 %v2348
    %v2350 = vand.u32 %v162, 4294901760
    %2351 = vmatpush.msra.mxu0 %v2350
    %v2352 = vand.u32 %v160, 4294901760
    %2353 = vmatpush.msra.mxu0 %v2352
    %v2354 = vand.u32 %v158, 4294901760
    %2355 = vmatpush.msra.mxu0 %v2354
    %v2356 = vand.u32 %v156, 4294901760
    %2357 = vmatpush.msra.mxu0 %v2356
    %v2358 = vand.u32 %v154, 4294901760
    %2359 = vmatpush.msra.mxu0 %v2358
    %v2360 = vand.u32 %v141, 4294901760
    %v2361 = vsub.f32 %v141, %v2360
    %v2362 = vand.u32 %v2361, 4294901760
    %v2363 = vsub.f32 %v2361, %v2362
    %v2364 = vand.u32 %v2363, 4294901760
    %2365 = vmatmul.f32.gmra.mxu0 %v2364
    %v2366 = vpop.f32.mrf.mxu0
    %v2367 = vadd.f32 %v1644, %v2366
    %2368 = vdwg.mxu0
    %v2369 = vand.u32 %v184, 4294901760
    %v2370 = vsub.f32 %v184, %v2369
    %v2371 = vand.u32 %v2370, 4294901760
    %v2372 = vsub.f32 %v2370, %v2371
    %v2373 = vand.u32 %v2372, 4294901760
    %2374 = vmatpush.msra.mxu0 %v2373
    %v2375 = vand.u32 %v182, 4294901760
    %v2376 = vsub.f32 %v182, %v2375
    %v2377 = vand.u32 %v2376, 4294901760
    %v2378 = vsub.f32 %v2376, %v2377
    %v2379 = vand.u32 %v2378, 4294901760
    %2380 = vmatpush.msra.mxu0 %v2379
    %v2381 = vand.u32 %v180, 4294901760
    %v2382 = vsub.f32 %v180, %v2381
    %v2383 = vand.u32 %v2382, 4294901760
    %v2384 = vsub.f32 %v2382, %v2383
    %v2385 = vand.u32 %v2384, 4294901760
    %2386 = vmatpush.msra.mxu0 %v2385
    %v2387 = vand.u32 %v178, 4294901760
    %v2388 = vsub.f32 %v178, %v2387
    %v2389 = vand.u32 %v2388, 4294901760
    %v2390 = vsub.f32 %v2388, %v2389
    %v2391 = vand.u32 %v2390, 4294901760
    %2392 = vmatpush.msra.mxu0 %v2391
    %v2393 = vand.u32 %v176, 4294901760
    %v2394 = vsub.f32 %v176, %v2393
    %v2395 = vand.u32 %v2394, 4294901760
    %v2396 = vsub.f32 %v2394, %v2395
    %v2397 = vand.u32 %v2396, 4294901760
    %2398 = vmatpush.msra.mxu0 %v2397
    %v2399 = vand.u32 %v174, 4294901760
    %v2400 = vsub.f32 %v174, %v2399
    %v2401 = vand.u32 %v2400, 4294901760
    %v2402 = vsub.f32 %v2400, %v2401
    %v2403 = vand.u32 %v2402, 4294901760
    %2404 = vmatpush.msra.mxu0 %v2403
    %v2405 = vand.u32 %v172, 4294901760
    %v2406 = vsub.f32 %v172, %v2405
    %v2407 = vand.u32 %v2406, 4294901760
    %v2408 = vsub.f32 %v2406, %v2407
    %v2409 = vand.u32 %v2408, 4294901760
    %2410 = vmatpush.msra.mxu0 %v2409
    %v2411 = vand.u32 %v170, 4294901760
    %v2412 = vsub.f32 %v170, %v2411
    %v2413 = vand.u32 %v2412, 4294901760
    %v2414 = vsub.f32 %v2412, %v2413
    %v2415 = vand.u32 %v2414, 4294901760
    %2416 = vmatpush.msra.mxu0 %v2415
    %v2417 = vand.u32 %v168, 4294901760
    %v2418 = vsub.f32 %v168, %v2417
    %v2419 = vand.u32 %v2418, 4294901760
    %v2420 = vsub.f32 %v2418, %v2419
    %v2421 = vand.u32 %v2420, 4294901760
    %2422 = vmatpush.msra.mxu0 %v2421
    %v2423 = vand.u32 %v166, 4294901760
    %v2424 = vsub.f32 %v166, %v2423
    %v2425 = vand.u32 %v2424, 4294901760
    %v2426 = vsub.f32 %v2424, %v2425
    %v2427 = vand.u32 %v2426, 4294901760
    %2428 = vmatpush.msra.mxu0 %v2427
    %v2429 = vand.u32 %v164, 4294901760
    %v2430 = vsub.f32 %v164, %v2429
    %v2431 = vand.u32 %v2430, 4294901760
    %v2432 = vsub.f32 %v2430, %v2431
    %v2433 = vand.u32 %v2432, 4294901760
    %2434 = vmatpush.msra.mxu0 %v2433
    %v2435 = vand.u32 %v162, 4294901760
    %v2436 = vsub.f32 %v162, %v2435
    %v2437 = vand.u32 %v2436, 4294901760
    %v2438 = vsub.f32 %v2436, %v2437
    %v2439 = vand.u32 %v2438, 4294901760
    %2440 = vmatpush.msra.mxu0 %v2439
    %v2441 = vand.u32 %v160, 4294901760
    %v2442 = vsub.f32 %v160, %v2441
    %v2443 = vand.u32 %v2442, 4294901760
    %v2444 = vsub.f32 %v2442, %v2443
    %v2445 = vand.u32 %v2444, 4294901760
    %2446 = vmatpush.msra.mxu0 %v2445
    %v2447 = vand.u32 %v158, 4294901760
    %v2448 = vsub.f32 %v158, %v2447
    %v2449 = vand.u32 %v2448, 4294901760
    %v2450 = vsub.f32 %v2448, %v2449
    %v2451 = vand.u32 %v2450, 4294901760
    %2452 = vmatpush.msra.mxu0 %v2451
    %v2453 = vand.u32 %v156, 4294901760
    %v2454 = vsub.f32 %v156, %v2453
    %v2455 = vand.u32 %v2454, 4294901760
    %v2456 = vsub.f32 %v2454, %v2455
    %v2457 = vand.u32 %v2456, 4294901760
    %2458 = vmatpush.msra.mxu0 %v2457
    %v2459 = vand.u32 %v154, 4294901760
    %v2460 = vsub.f32 %v154, %v2459
    %v2461 = vand.u32 %v2460, 4294901760
    %v2462 = vsub.f32 %v2460, %v2461
    %v2463 = vand.u32 %v2462, 4294901760
    %2464 = vmatpush.msra.mxu0 %v2463
    %v2465 = vand.u32 %v141, 4294901760
    %2466 = vmatmul.f32.gmra.mxu0 %v2465
    %v2467 = vpop.f32.mrf.mxu0
    %v2468 = vadd.f32 %v2367, %v2467
    %2469 = vdwg.mxu0
    %v2470 = vand.u32 %v184, 4294901760
    %v2471 = vsub.f32 %v184, %v2470
    %2472 = vmatpush.msra.mxu0 %v2471
    %v2473 = vand.u32 %v182, 4294901760
    %v2474 = vsub.f32 %v182, %v2473
    %2475 = vmatpush.msra.mxu0 %v2474
    %v2476 = vand.u32 %v180, 4294901760
    %v2477 = vsub.f32 %v180, %v2476
    %2478 = vmatpush.msra.mxu0 %v2477
    %v2479 = vand.u32 %v178, 4294901760
    %v2480 = vsub.f32 %v178, %v2479
    %2481 = vmatpush.msra.mxu0 %v2480
    %v2482 = vand.u32 %v176, 4294901760
    %v2483 = vsub.f32 %v176, %v2482
    %2484 = vmatpush.msra.mxu0 %v2483
    %v2485 = vand.u32 %v174, 4294901760
    %v2486 = vsub.f32 %v174, %v2485
    %2487 = vmatpush.msra.mxu0 %v2486
    %v2488 = vand.u32 %v172, 4294901760
    %v2489 = vsub.f32 %v172, %v2488
    %2490 = vmatpush.msra.mxu0 %v2489
    %v2491 = vand.u32 %v170, 4294901760
    %v2492 = vsub.f32 %v170, %v2491
    %2493 = vmatpush.msra.mxu0 %v2492
    %v2494 = vand.u32 %v168, 4294901760
    %v2495 = vsub.f32 %v168, %v2494
    %2496 = vmatpush.msra.mxu0 %v2495
    %v2497 = vand.u32 %v166, 4294901760
    %v2498 = vsub.f32 %v166, %v2497
    %2499 = vmatpush.msra.mxu0 %v2498
    %v2500 = vand.u32 %v164, 4294901760
    %v2501 = vsub.f32 %v164, %v2500
    %2502 = vmatpush.msra.mxu0 %v2501
    %v2503 = vand.u32 %v162, 4294901760
    %v2504 = vsub.f32 %v162, %v2503
    %2505 = vmatpush.msra.mxu0 %v2504
    %v2506 = vand.u32 %v160, 4294901760
    %v2507 = vsub.f32 %v160, %v2506
    %2508 = vmatpush.msra.mxu0 %v2507
    %v2509 = vand.u32 %v158, 4294901760
    %v2510 = vsub.f32 %v158, %v2509
    %2511 = vmatpush.msra.mxu0 %v2510
    %v2512 = vand.u32 %v156, 4294901760
    %v2513 = vsub.f32 %v156, %v2512
    %2514 = vmatpush.msra.mxu0 %v2513
    %v2515 = vand.u32 %v154, 4294901760
    %v2516 = vsub.f32 %v154, %v2515
    %2517 = vmatpush.msra.mxu0 %v2516
    %v2518 = vand.u32 %v141, 4294901760
    %v2519 = vsub.f32 %v141, %v2518
    %2520 = vmatmul.f32.gmra.mxu0 %v2519
    %v2521 = vpop.f32.mrf.mxu0
    %v2522 = vadd.f32 %v2468, %v2521
    %2523 = vdwg.mxu0
    %v2524 = vand.u32 %v184, 4294901760
    %2525 = vmatpush.msra.mxu0 %v2524
    %v2526 = vand.u32 %v182, 4294901760
    %2527 = vmatpush.msra.mxu0 %v2526
    %v2528 = vand.u32 %v180, 4294901760
    %2529 = vmatpush.msra.mxu0 %v2528
    %v2530 = vand.u32 %v178, 4294901760
    %2531 = vmatpush.msra.mxu0 %v2530
    %v2532 = vand.u32 %v176, 4294901760
    %2533 = vmatpush.msra.mxu0 %v2532
    %v2534 = vand.u32 %v174, 4294901760
    %2535 = vmatpush.msra.mxu0 %v2534
    %v2536 = vand.u32 %v172, 4294901760
    %2537 = vmatpush.msra.mxu0 %v2536
    %v2538 = vand.u32 %v170, 4294901760
    %2539 = vmatpush.msra.mxu0 %v2538
    %v2540 = vand.u32 %v168, 4294901760
    %2541 = vmatpush.msra.mxu0 %v2540
    %v2542 = vand.u32 %v166, 4294901760
    %2543 = vmatpush.msra.mxu0 %v2542
    %v2544 = vand.u32 %v164, 4294901760
    %2545 = vmatpush.msra.mxu0 %v2544
    %v2546 = vand.u32 %v162, 4294901760
    %2547 = vmatpush.msra.mxu0 %v2546
    %v2548 = vand.u32 %v160, 4294901760
    %2549 = vmatpush.msra.mxu0 %v2548
    %v2550 = vand.u32 %v158, 4294901760
    %2551 = vmatpush.msra.mxu0 %v2550
    %v2552 = vand.u32 %v156, 4294901760
    %2553 = vmatpush.msra.mxu0 %v2552
    %v2554 = vand.u32 %v154, 4294901760
    %2555 = vmatpush.msra.mxu0 %v2554
    %v2556 = vand.u32 %v141, 4294901760
    %v2557 = vsub.f32 %v141, %v2556
    %v2558 = vand.u32 %v2557, 4294901760
    %2559 = vmatmul.f32.gmra.mxu0 %v2558
    %v2560 = vpop.f32.mrf.mxu0
    %v2561 = vadd.f32 %v2522, %v2560
    %2562 = vdwg.mxu0
    %v2563 = vand.u32 %v184, 4294901760
    %v2564 = vsub.f32 %v184, %v2563
    %v2565 = vand.u32 %v2564, 4294901760
    %2566 = vmatpush.msra.mxu0 %v2565
    %v2567 = vand.u32 %v182, 4294901760
    %v2568 = vsub.f32 %v182, %v2567
    %v2569 = vand.u32 %v2568, 4294901760
    %2570 = vmatpush.msra.mxu0 %v2569
    %v2571 = vand.u32 %v180, 4294901760
    %v2572 = vsub.f32 %v180, %v2571
    %v2573 = vand.u32 %v2572, 4294901760
    %2574 = vmatpush.msra.mxu0 %v2573
    %v2575 = vand.u32 %v178, 4294901760
    %v2576 = vsub.f32 %v178, %v2575
    %v2577 = vand.u32 %v2576, 4294901760
    %2578 = vmatpush.msra.mxu0 %v2577
    %v2579 = vand.u32 %v176, 4294901760
    %v2580 = vsub.f32 %v176, %v2579
    %v2581 = vand.u32 %v2580, 4294901760
    %2582 = vmatpush.msra.mxu0 %v2581
    %v2583 = vand.u32 %v174, 4294901760
    %v2584 = vsub.f32 %v174, %v2583
    %v2585 = vand.u32 %v2584, 4294901760
    %2586 = vmatpush.msra.mxu0 %v2585
    %v2587 = vand.u32 %v172, 4294901760
    %v2588 = vsub.f32 %v172, %v2587
    %v2589 = vand.u32 %v2588, 4294901760
    %2590 = vmatpush.msra.mxu0 %v2589
    %v2591 = vand.u32 %v170, 4294901760
    %v2592 = vsub.f32 %v170, %v2591
    %v2593 = vand.u32 %v2592, 4294901760
    %2594 = vmatpush.msra.mxu0 %v2593
    %v2595 = vand.u32 %v168, 4294901760
    %v2596 = vsub.f32 %v168, %v2595
    %v2597 = vand.u32 %v2596, 4294901760
    %2598 = vmatpush.msra.mxu0 %v2597
    %v2599 = vand.u32 %v166, 4294901760
    %v2600 = vsub.f32 %v166, %v2599
    %v2601 = vand.u32 %v2600, 4294901760
    %2602 = vmatpush.msra.mxu0 %v2601
    %v2603 = vand.u32 %v164, 4294901760
    %v2604 = vsub.f32 %v164, %v2603
    %v2605 = vand.u32 %v2604, 4294901760
    %2606 = vmatpush.msra.mxu0 %v2605
    %v2607 = vand.u32 %v162, 4294901760
    %v2608 = vsub.f32 %v162, %v2607
    %v2609 = vand.u32 %v2608, 4294901760
    %2610 = vmatpush.msra.mxu0 %v2609
    %v2611 = vand.u32 %v160, 4294901760
    %v2612 = vsub.f32 %v160, %v2611
    %v2613 = vand.u32 %v2612, 4294901760
    %2614 = vmatpush.msra.mxu0 %v2613
    %v2615 = vand.u32 %v158, 4294901760
    %v2616 = vsub.f32 %v158, %v2615
    %v2617 = vand.u32 %v2616, 4294901760
    %2618 = vmatpush.msra.mxu0 %v2617
    %v2619 = vand.u32 %v156, 4294901760
    %v2620 = vsub.f32 %v156, %v2619
    %v2621 = vand.u32 %v2620, 4294901760
    %2622 = vmatpush.msra.mxu0 %v2621
    %v2623 = vand.u32 %v154, 4294901760
    %v2624 = vsub.f32 %v154, %v2623
    %v2625 = vand.u32 %v2624, 4294901760
    %2626 = vmatpush.msra.mxu0 %v2625
    %v2627 = vand.u32 %v141, 4294901760
    %2628 = vmatmul.f32.gmra.mxu0 %v2627
    %v2629 = vpop.f32.mrf.mxu0
    %v2630 = vadd.f32 %v2561, %v2629
    %2631 = vdwg.mxu0
    %v2632 = vand.u32 %v184, 4294901760
    %2633 = vmatpush.msra.mxu0 %v2632
    %v2634 = vand.u32 %v182, 4294901760
    %2635 = vmatpush.msra.mxu0 %v2634
    %v2636 = vand.u32 %v180, 4294901760
    %2637 = vmatpush.msra.mxu0 %v2636
    %v2638 = vand.u32 %v178, 4294901760
    %2639 = vmatpush.msra.mxu0 %v2638
    %v2640 = vand.u32 %v176, 4294901760
    %2641 = vmatpush.msra.mxu0 %v2640
    %v2642 = vand.u32 %v174, 4294901760
    %2643 = vmatpush.msra.mxu0 %v2642
    %v2644 = vand.u32 %v172, 4294901760
    %2645 = vmatpush.msra.mxu0 %v2644
    %v2646 = vand.u32 %v170, 4294901760
    %2647 = vmatpush.msra.mxu0 %v2646
    %v2648 = vand.u32 %v168, 4294901760
    %2649 = vmatpush.msra.mxu0 %v2648
    %v2650 = vand.u32 %v166, 4294901760
    %2651 = vmatpush.msra.mxu0 %v2650
    %v2652 = vand.u32 %v164, 4294901760
    %2653 = vmatpush.msra.mxu0 %v2652
    %v2654 = vand.u32 %v162, 4294901760
    %2655 = vmatpush.msra.mxu0 %v2654
    %v2656 = vand.u32 %v160, 4294901760
    %2657 = vmatpush.msra.mxu0 %v2656
    %v2658 = vand.u32 %v158, 4294901760
    %2659 = vmatpush.msra.mxu0 %v2658
    %v2660 = vand.u32 %v156, 4294901760
    %2661 = vmatpush.msra.mxu0 %v2660
    %v2662 = vand.u32 %v154, 4294901760
    %2663 = vmatpush.msra.mxu0 %v2662
    %v2664 = vand.u32 %v141, 4294901760
    %2665 = vmatmul.f32.gmra.mxu0 %v2664
    %v2666 = vpop.f32.mrf.mxu0
    %v2667 = vadd.f32 %v2630, %v2666
    %2668 = vdwg.mxu0
    %v2669 = vand.u32 %v216, 4294901760
    %2670 = vmatpush.msra.mxu0 %v2669
    %v2671 = vand.u32 %v214, 4294901760
    %2672 = vmatpush.msra.mxu0 %v2671
    %v2673 = vand.u32 %v212, 4294901760
    %2674 = vmatpush.msra.mxu0 %v2673
    %v2675 = vand.u32 %v210, 4294901760
    %2676 = vmatpush.msra.mxu0 %v2675
    %v2677 = vand.u32 %v208, 4294901760
    %2678 = vmatpush.msra.mxu0 %v2677
    %v2679 = vand.u32 %v206, 4294901760
    %2680 = vmatpush.msra.mxu0 %v2679
    %v2681 = vand.u32 %v204, 4294901760
    %2682 = vmatpush.msra.mxu0 %v2681
    %v2683 = vand.u32 %v202, 4294901760
    %2684 = vmatpush.msra.mxu0 %v2683
    %v2685 = vand.u32 %v200, 4294901760
    %2686 = vmatpush.msra.mxu0 %v2685
    %v2687 = vand.u32 %v198, 4294901760
    %2688 = vmatpush.msra.mxu0 %v2687
    %v2689 = vand.u32 %v196, 4294901760
    %2690 = vmatpush.msra.mxu0 %v2689
    %v2691 = vand.u32 %v194, 4294901760
    %2692 = vmatpush.msra.mxu0 %v2691
    %v2693 = vand.u32 %v192, 4294901760
    %2694 = vmatpush.msra.mxu0 %v2693
    %v2695 = vand.u32 %v190, 4294901760
    %2696 = vmatpush.msra.mxu0 %v2695
    %v2697 = vand.u32 %v188, 4294901760
    %2698 = vmatpush.msra.mxu0 %v2697
    %v2699 = vand.u32 %v186, 4294901760
    %2700 = vmatpush.msra.mxu0 %v2699
    %v2701 = vand.u32 %v142, 4294901760
    %v2702 = vsub.f32 %v142, %v2701
    %v2703 = vand.u32 %v2702, 4294901760
    %v2704 = vsub.f32 %v2702, %v2703
    %v2705 = vand.u32 %v2704, 4294901760
    %2706 = vmatmul.f32.gmra.mxu0 %v2705
    %v2707 = vpop.f32.mrf.mxu0
    %v2708 = vadd.f32 %v2667, %v2707
    %2709 = vdwg.mxu0
    %v2710 = vand.u32 %v216, 4294901760
    %v2711 = vsub.f32 %v216, %v2710
    %v2712 = vand.u32 %v2711, 4294901760
    %v2713 = vsub.f32 %v2711, %v2712
    %v2714 = vand.u32 %v2713, 4294901760
    %2715 = vmatpush.msra.mxu0 %v2714
    %v2716 = vand.u32 %v214, 4294901760
    %v2717 = vsub.f32 %v214, %v2716
    %v2718 = vand.u32 %v2717, 4294901760
    %v2719 = vsub.f32 %v2717, %v2718
    %v2720 = vand.u32 %v2719, 4294901760
    %2721 = vmatpush.msra.mxu0 %v2720
    %v2722 = vand.u32 %v212, 4294901760
    %v2723 = vsub.f32 %v212, %v2722
    %v2724 = vand.u32 %v2723, 4294901760
    %v2725 = vsub.f32 %v2723, %v2724
    %v2726 = vand.u32 %v2725, 4294901760
    %2727 = vmatpush.msra.mxu0 %v2726
    %v2728 = vand.u32 %v210, 4294901760
    %v2729 = vsub.f32 %v210, %v2728
    %v2730 = vand.u32 %v2729, 4294901760
    %v2731 = vsub.f32 %v2729, %v2730
    %v2732 = vand.u32 %v2731, 4294901760
    %2733 = vmatpush.msra.mxu0 %v2732
    %v2734 = vand.u32 %v208, 4294901760
    %v2735 = vsub.f32 %v208, %v2734
    %v2736 = vand.u32 %v2735, 4294901760
    %v2737 = vsub.f32 %v2735, %v2736
    %v2738 = vand.u32 %v2737, 4294901760
    %2739 = vmatpush.msra.mxu0 %v2738
    %v2740 = vand.u32 %v206, 4294901760
    %v2741 = vsub.f32 %v206, %v2740
    %v2742 = vand.u32 %v2741, 4294901760
    %v2743 = vsub.f32 %v2741, %v2742
    %v2744 = vand.u32 %v2743, 4294901760
    %2745 = vmatpush.msra.mxu0 %v2744
    %v2746 = vand.u32 %v204, 4294901760
    %v2747 = vsub.f32 %v204, %v2746
    %v2748 = vand.u32 %v2747, 4294901760
    %v2749 = vsub.f32 %v2747, %v2748
    %v2750 = vand.u32 %v2749, 4294901760
    %2751 = vmatpush.msra.mxu0 %v2750
    %v2752 = vand.u32 %v202, 4294901760
    %v2753 = vsub.f32 %v202, %v2752
    %v2754 = vand.u32 %v2753, 4294901760
    %v2755 = vsub.f32 %v2753, %v2754
    %v2756 = vand.u32 %v2755, 4294901760
    %2757 = vmatpush.msra.mxu0 %v2756
    %v2758 = vand.u32 %v200, 4294901760
    %v2759 = vsub.f32 %v200, %v2758
    %v2760 = vand.u32 %v2759, 4294901760
    %v2761 = vsub.f32 %v2759, %v2760
    %v2762 = vand.u32 %v2761, 4294901760
    %2763 = vmatpush.msra.mxu0 %v2762
    %v2764 = vand.u32 %v198, 4294901760
    %v2765 = vsub.f32 %v198, %v2764
    %v2766 = vand.u32 %v2765, 4294901760
    %v2767 = vsub.f32 %v2765, %v2766
    %v2768 = vand.u32 %v2767, 4294901760
    %2769 = vmatpush.msra.mxu0 %v2768
    %v2770 = vand.u32 %v196, 4294901760
    %v2771 = vsub.f32 %v196, %v2770
    %v2772 = vand.u32 %v2771, 4294901760
    %v2773 = vsub.f32 %v2771, %v2772
    %v2774 = vand.u32 %v2773, 4294901760
    %2775 = vmatpush.msra.mxu0 %v2774
    %v2776 = vand.u32 %v194, 4294901760
    %v2777 = vsub.f32 %v194, %v2776
    %v2778 = vand.u32 %v2777, 4294901760
    %v2779 = vsub.f32 %v2777, %v2778
    %v2780 = vand.u32 %v2779, 4294901760
    %2781 = vmatpush.msra.mxu0 %v2780
    %v2782 = vand.u32 %v192, 4294901760
    %v2783 = vsub.f32 %v192, %v2782
    %v2784 = vand.u32 %v2783, 4294901760
    %v2785 = vsub.f32 %v2783, %v2784
    %v2786 = vand.u32 %v2785, 4294901760
    %2787 = vmatpush.msra.mxu0 %v2786
    %v2788 = vand.u32 %v190, 4294901760
    %v2789 = vsub.f32 %v190, %v2788
    %v2790 = vand.u32 %v2789, 4294901760
    %v2791 = vsub.f32 %v2789, %v2790
    %v2792 = vand.u32 %v2791, 4294901760
    %2793 = vmatpush.msra.mxu0 %v2792
    %v2794 = vand.u32 %v188, 4294901760
    %v2795 = vsub.f32 %v188, %v2794
    %v2796 = vand.u32 %v2795, 4294901760
    %v2797 = vsub.f32 %v2795, %v2796
    %v2798 = vand.u32 %v2797, 4294901760
    %2799 = vmatpush.msra.mxu0 %v2798
    %v2800 = vand.u32 %v186, 4294901760
    %v2801 = vsub.f32 %v186, %v2800
    %v2802 = vand.u32 %v2801, 4294901760
    %v2803 = vsub.f32 %v2801, %v2802
    %v2804 = vand.u32 %v2803, 4294901760
    %2805 = vmatpush.msra.mxu0 %v2804
    %v2806 = vand.u32 %v142, 4294901760
    %2807 = vmatmul.f32.gmra.mxu0 %v2806
    %v2808 = vpop.f32.mrf.mxu0
    %v2809 = vadd.f32 %v2708, %v2808
    %2810 = vdwg.mxu0
    %v2811 = vand.u32 %v216, 4294901760
    %v2812 = vsub.f32 %v216, %v2811
    %2813 = vmatpush.msra.mxu0 %v2812
    %v2814 = vand.u32 %v214, 4294901760
    %v2815 = vsub.f32 %v214, %v2814
    %2816 = vmatpush.msra.mxu0 %v2815
    %v2817 = vand.u32 %v212, 4294901760
    %v2818 = vsub.f32 %v212, %v2817
    %2819 = vmatpush.msra.mxu0 %v2818
    %v2820 = vand.u32 %v210, 4294901760
    %v2821 = vsub.f32 %v210, %v2820
    %2822 = vmatpush.msra.mxu0 %v2821
    %v2823 = vand.u32 %v208, 4294901760
    %v2824 = vsub.f32 %v208, %v2823
    %2825 = vmatpush.msra.mxu0 %v2824
    %v2826 = vand.u32 %v206, 4294901760
    %v2827 = vsub.f32 %v206, %v2826
    %2828 = vmatpush.msra.mxu0 %v2827
    %v2829 = vand.u32 %v204, 4294901760
    %v2830 = vsub.f32 %v204, %v2829
    %2831 = vmatpush.msra.mxu0 %v2830
    %v2832 = vand.u32 %v202, 4294901760
    %v2833 = vsub.f32 %v202, %v2832
    %2834 = vmatpush.msra.mxu0 %v2833
    %v2835 = vand.u32 %v200, 4294901760
    %v2836 = vsub.f32 %v200, %v2835
    %2837 = vmatpush.msra.mxu0 %v2836
    %v2838 = vand.u32 %v198, 4294901760
    %v2839 = vsub.f32 %v198, %v2838
    %2840 = vmatpush.msra.mxu0 %v2839
    %v2841 = vand.u32 %v196, 4294901760
    %v2842 = vsub.f32 %v196, %v2841
    %2843 = vmatpush.msra.mxu0 %v2842
    %v2844 = vand.u32 %v194, 4294901760
    %v2845 = vsub.f32 %v194, %v2844
    %2846 = vmatpush.msra.mxu0 %v2845
    %v2847 = vand.u32 %v192, 4294901760
    %v2848 = vsub.f32 %v192, %v2847
    %2849 = vmatpush.msra.mxu0 %v2848
    %v2850 = vand.u32 %v190, 4294901760
    %v2851 = vsub.f32 %v190, %v2850
    %2852 = vmatpush.msra.mxu0 %v2851
    %v2853 = vand.u32 %v188, 4294901760
    %v2854 = vsub.f32 %v188, %v2853
    %2855 = vmatpush.msra.mxu0 %v2854
    %v2856 = vand.u32 %v186, 4294901760
    %v2857 = vsub.f32 %v186, %v2856
    %2858 = vmatpush.msra.mxu0 %v2857
    %v2859 = vand.u32 %v142, 4294901760
    %v2860 = vsub.f32 %v142, %v2859
    %2861 = vmatmul.f32.gmra.mxu0 %v2860
    %v2862 = vpop.f32.mrf.mxu0
    %v2863 = vadd.f32 %v2809, %v2862
    %2864 = vdwg.mxu0
    %v2865 = vand.u32 %v216, 4294901760
    %2866 = vmatpush.msra.mxu0 %v2865
    %v2867 = vand.u32 %v214, 4294901760
    %2868 = vmatpush.msra.mxu0 %v2867
    %v2869 = vand.u32 %v212, 4294901760
    %2870 = vmatpush.msra.mxu0 %v2869
    %v2871 = vand.u32 %v210, 4294901760
    %2872 = vmatpush.msra.mxu0 %v2871
    %v2873 = vand.u32 %v208, 4294901760
    %2874 = vmatpush.msra.mxu0 %v2873
    %v2875 = vand.u32 %v206, 4294901760
    %2876 = vmatpush.msra.mxu0 %v2875
    %v2877 = vand.u32 %v204, 4294901760
    %2878 = vmatpush.msra.mxu0 %v2877
    %v2879 = vand.u32 %v202, 4294901760
    %2880 = vmatpush.msra.mxu0 %v2879
    %v2881 = vand.u32 %v200, 4294901760
    %2882 = vmatpush.msra.mxu0 %v2881
    %v2883 = vand.u32 %v198, 4294901760
    %2884 = vmatpush.msra.mxu0 %v2883
    %v2885 = vand.u32 %v196, 4294901760
    %2886 = vmatpush.msra.mxu0 %v2885
    %v2887 = vand.u32 %v194, 4294901760
    %2888 = vmatpush.msra.mxu0 %v2887
    %v2889 = vand.u32 %v192, 4294901760
    %2890 = vmatpush.msra.mxu0 %v2889
    %v2891 = vand.u32 %v190, 4294901760
    %2892 = vmatpush.msra.mxu0 %v2891
    %v2893 = vand.u32 %v188, 4294901760
    %2894 = vmatpush.msra.mxu0 %v2893
    %v2895 = vand.u32 %v186, 4294901760
    %2896 = vmatpush.msra.mxu0 %v2895
    %v2897 = vand.u32 %v142, 4294901760
    %v2898 = vsub.f32 %v142, %v2897
    %v2899 = vand.u32 %v2898, 4294901760
    %2900 = vmatmul.f32.gmra.mxu0 %v2899
    %v2901 = vpop.f32.mrf.mxu0
    %v2902 = vadd.f32 %v2863, %v2901
    %2903 = vdwg.mxu0
    %v2904 = vand.u32 %v216, 4294901760
    %v2905 = vsub.f32 %v216, %v2904
    %v2906 = vand.u32 %v2905, 4294901760
    %2907 = vmatpush.msra.mxu0 %v2906
    %v2908 = vand.u32 %v214, 4294901760
    %v2909 = vsub.f32 %v214, %v2908
    %v2910 = vand.u32 %v2909, 4294901760
    %2911 = vmatpush.msra.mxu0 %v2910
    %v2912 = vand.u32 %v212, 4294901760
    %v2913 = vsub.f32 %v212, %v2912
    %v2914 = vand.u32 %v2913, 4294901760
    %2915 = vmatpush.msra.mxu0 %v2914
    %v2916 = vand.u32 %v210, 4294901760
    %v2917 = vsub.f32 %v210, %v2916
    %v2918 = vand.u32 %v2917, 4294901760
    %2919 = vmatpush.msra.mxu0 %v2918
    %v2920 = vand.u32 %v208, 4294901760
    %v2921 = vsub.f32 %v208, %v2920
    %v2922 = vand.u32 %v2921, 4294901760
    %2923 = vmatpush.msra.mxu0 %v2922
    %v2924 = vand.u32 %v206, 4294901760
    %v2925 = vsub.f32 %v206, %v2924
    %v2926 = vand.u32 %v2925, 4294901760
    %2927 = vmatpush.msra.mxu0 %v2926
    %v2928 = vand.u32 %v204, 4294901760
    %v2929 = vsub.f32 %v204, %v2928
    %v2930 = vand.u32 %v2929, 4294901760
    %2931 = vmatpush.msra.mxu0 %v2930
    %v2932 = vand.u32 %v202, 4294901760
    %v2933 = vsub.f32 %v202, %v2932
    %v2934 = vand.u32 %v2933, 4294901760
    %2935 = vmatpush.msra.mxu0 %v2934
    %v2936 = vand.u32 %v200, 4294901760
    %v2937 = vsub.f32 %v200, %v2936
    %v2938 = vand.u32 %v2937, 4294901760
    %2939 = vmatpush.msra.mxu0 %v2938
    %v2940 = vand.u32 %v198, 4294901760
    %v2941 = vsub.f32 %v198, %v2940
    %v2942 = vand.u32 %v2941, 4294901760
    %2943 = vmatpush.msra.mxu0 %v2942
    %v2944 = vand.u32 %v196, 4294901760
    %v2945 = vsub.f32 %v196, %v2944
    %v2946 = vand.u32 %v2945, 4294901760
    %2947 = vmatpush.msra.mxu0 %v2946
    %v2948 = vand.u32 %v194, 4294901760
    %v2949 = vsub.f32 %v194, %v2948
    %v2950 = vand.u32 %v2949, 4294901760
    %2951 = vmatpush.msra.mxu0 %v2950
    %v2952 = vand.u32 %v192, 4294901760
    %v2953 = vsub.f32 %v192, %v2952
    %v2954 = vand.u32 %v2953, 4294901760
    %2955 = vmatpush.msra.mxu0 %v2954
    %v2956 = vand.u32 %v190, 4294901760
    %v2957 = vsub.f32 %v190, %v2956
    %v2958 = vand.u32 %v2957, 4294901760
    %2959 = vmatpush.msra.mxu0 %v2958
    %v2960 = vand.u32 %v188, 4294901760
    %v2961 = vsub.f32 %v188, %v2960
    %v2962 = vand.u32 %v2961, 4294901760
    %2963 = vmatpush.msra.mxu0 %v2962
    %v2964 = vand.u32 %v186, 4294901760
    %v2965 = vsub.f32 %v186, %v2964
    %v2966 = vand.u32 %v2965, 4294901760
    %2967 = vmatpush.msra.mxu0 %v2966
    %v2968 = vand.u32 %v142, 4294901760
    %2969 = vmatmul.f32.gmra.mxu0 %v2968
    %v2970 = vpop.f32.mrf.mxu0
    %v2971 = vadd.f32 %v2902, %v2970
    %2972 = vdwg.mxu0
    %v2973 = vand.u32 %v216, 4294901760
    %2974 = vmatpush.msra.mxu0 %v2973
    %v2975 = vand.u32 %v214, 4294901760
    %2976 = vmatpush.msra.mxu0 %v2975
    %v2977 = vand.u32 %v212, 4294901760
    %2978 = vmatpush.msra.mxu0 %v2977
    %v2979 = vand.u32 %v210, 4294901760
    %2980 = vmatpush.msra.mxu0 %v2979
    %v2981 = vand.u32 %v208, 4294901760
    %2982 = vmatpush.msra.mxu0 %v2981
    %v2983 = vand.u32 %v206, 4294901760
    %2984 = vmatpush.msra.mxu0 %v2983
    %v2985 = vand.u32 %v204, 4294901760
    %2986 = vmatpush.msra.mxu0 %v2985
    %v2987 = vand.u32 %v202, 4294901760
    %2988 = vmatpush.msra.mxu0 %v2987
    %v2989 = vand.u32 %v200, 4294901760
    %2990 = vmatpush.msra.mxu0 %v2989
    %v2991 = vand.u32 %v198, 4294901760
    %2992 = vmatpush.msra.mxu0 %v2991
    %v2993 = vand.u32 %v196, 4294901760
    %2994 = vmatpush.msra.mxu0 %v2993
    %v2995 = vand.u32 %v194, 4294901760
    %2996 = vmatpush.msra.mxu0 %v2995
    %v2997 = vand.u32 %v192, 4294901760
    %2998 = vmatpush.msra.mxu0 %v2997
    %v2999 = vand.u32 %v190, 4294901760
    %3000 = vmatpush.msra.mxu0 %v2999
    %v3001 = vand.u32 %v188, 4294901760
    %3002 = vmatpush.msra.mxu0 %v3001
    %v3003 = vand.u32 %v186, 4294901760
    %3004 = vmatpush.msra.mxu0 %v3003
    %v3005 = vand.u32 %v142, 4294901760
    %3006 = vmatmul.f32.gmra.mxu0 %v3005
    %v3007 = vpop.f32.mrf.mxu0
    %v3008 = vadd.f32 %v2971, %v3007
    %3009 = vdwg.mxu0
    %v3010 = vxor.u32 %v2326, 2147483648
    %v3011 = vxor.u32 %v3008, 2147483648
    %v3012 = vmul.f32 %v3010, 1.442695
    %v3013 = vpow.pop %v3012
    %v3014 = vmul.f32 %v3011, 1.442695
    %v3015 = vpow.pop %v3014
    %v3016 = vadd.f32 %v3013, 1.0
    %v3017 = vadd.f32 %v3015, 1.0
    %v3018 = vrcp.pop %v3016
    %v3019 = vmul.f32 %v3016, %v3018
    %v3020 = vsub.f32 1.0, %v3019
    %v3021 = vmul.f32 %v3018, %v3020
    %v3022 = vadd.f32 %v3018, %v3021
    %vm3023 = vweird.f32 %v3016
    %vm3024 = vweird.f32 %v3018
    %vm3025 = vmor %vm3023, %vm3024
    %v3026 = vsel %vm3025, %v3018, %v3022
    %v3027 = vand.u32 2147483647, %v3016
    %vm3028 = vcmp.eq.f32.partialorder %v3027, 8.507059e+37
    %v3029 = vand.u32 %v3016, 2147483648
    %v3030 = vor.u32 1.1754944e-38, %v3029
    %v3031 = vsel %vm3028, %v3030, %v3026
    %v3032 = vmul.f32 1.0, %v3031
    %v3033 = vrcp.pop %v3017
    %v3034 = vmul.f32 %v3017, %v3033
    %v3035 = vsub.f32 1.0, %v3034
    %v3036 = vmul.f32 %v3033, %v3035
    %v3037 = vadd.f32 %v3033, %v3036
    %vm3038 = vweird.f32 %v3017
    %vm3039 = vweird.f32 %v3033
    %vm3040 = vmor %vm3038, %vm3039
    %v3041 = vsel %vm3040, %v3033, %v3037
    %v3042 = vand.u32 2147483647, %v3017
    %vm3043 = vcmp.eq.f32.partialorder %v3042, 8.507059e+37
    %v3044 = vand.u32 %v3017, 2147483648
    %v3045 = vor.u32 1.1754944e-38, %v3044
    %v3046 = vsel %vm3043, %v3045, %v3041
    %v3047 = vmul.f32 1.0, %v3046
    %v3050 = vrot.slane %v3047, 7
    %vm3051 = vcmask 1040384
    %v3052 = vsel %vm3051, %v3032, %v3050
    %v3053 = vsel %vm135, %v3032, %v3050
    %v3054 = vrot.slane %v3053, 1
    %v3055 = vperm.slane %v3052, 0
    %v3056 = vperm.slane %v3052, 1
    %v3057 = vperm.slane %v3054, 0
    %v3058 = vperm.slane %v3054, 1
    %v3059 = vrot.slane %v3056, 4
    %v3060 = vrot.slane %v3058, 4
    %v3061 = vsel %vm59, %v3055, %v3059
    %v3062 = vsel %vm59, %v3057, %v3060
    %v3065 = vmul.f32 %v44, %v3061
    %v3066 = vmul.f32 %v45, %v3062
    %3067 = vst [vmem:[#allocation7] sm:$0xff] %v3065
    %3068 = vst [vmem:[#allocation7 + $0x8] sm:$0xff] %v3066
    // Predicated region
    $region18: #{tpu_custom_call.1} parent=1 // pred_check
      _
    $region19: #{tpu_custom_call.1} parent=1 // pred_check_branch
      %3070 = sbr.rel (0) target = $region21
    $region20: #{tpu_custom_call.1} parent=1 // pred_region
      %3072 = vsyncadd [#allocation4], 0
      %s3073 = sshll.u32 [#allocation7], 4
      %s3074 = int_to_ptr.vmem [resolvable:$true] %s3073
      %s3075 = sshll.u32 %s2, 4
      %s3076 = int_to_ptr.hbm [resolvable:$true] %s3075
      %3081 = dma.vmem_to_hbm [thread:$0]  %s3074, 256, %s3076, [#allocation4], 128, 128, 8
    $region21: #{tpu_custom_call.1} parent=1 // pred_fallthru
      _
    // Predicated region
    $region22: #{tpu_custom_call.1} parent=1 // pred_check
      _
    $region23: #{tpu_custom_call.1} parent=1 // pred_check_branch
      %3083 = sbr.rel (0) target = $region25
    $region24: #{tpu_custom_call.1} parent=1 // pred_region
      %3085 = dma.done [#allocation4], 256
    $region25: #{tpu_custom_call.1} parent=1 // pred_fallthru
      _
    %3086 = vsyncpa [#allocation3], 1
    %3087 = vsyncpa [#allocation6], 1
    %3088 = vsyncpa [#allocation4], 1

</llo_original>
